<compile_context>
chip_gen: v7x
topology: tpu7x:2x2x1
jax: 0.10.0
libtpu: 0.0.40
codegen_flags: <defaults>
</compile_context>

<pallas_src>
import functools

import jax
import jax.numpy as jnp
from jax.experimental import pallas as pl
from jax.experimental.pallas import tpu as pltpu


# ---------------------------------------------------------------------------
# Fused kernel: causal depthwise conv + SiLU gate + residual, then MLP
# (Linear -> GELU -> Linear) + residual; hidden dim optionally tiled as an
# innermost reduction axis with an fp32 accumulator.
# ---------------------------------------------------------------------------
def _fused_block_kernel(x_ref, halo_ref, cw_ref, cb_ref, w1_ref, b1_ref,
                        w2_ref, b2_ref, o_ref, *scratch,
                        K, TS, PAD, single_h, has_hm):
    # x_ref   : (1, TS, D)     input tile (native dtype)
    # halo_ref: (1, 1, PAD, D) last K-1 raw-x rows of the previous sequence
    #                          tile (zero for the first tile), front-padded to
    #                          PAD rows so the store into pad_ref is aligned.
    # cw_ref  : (K, D) f32     conv weights       cb_ref: (1, D) f32 conv bias
    # w1_ref  : (D, TH)        first MLP weight   b1_ref: (1, TH) f32
    # w2_ref  : (TH, D)        second MLP weight  b2_ref: (1, D) f32
    # o_ref   : (1, TS, D)     output tile
    # scratch : [pad (PAD+TS,D) x-dtype if K>1]
    #           [h (TS,D) f32, hm (TS,D) matmul-dtype?, acc (TS,D) f32  if n_h>1]
    h_idx = pl.program_id(2)
    n_h = pl.num_programs(2)

    i = 0
    pad_ref = None
    if K > 1:
        pad_ref = scratch[i]; i += 1
    if not single_h:
        h_ref = scratch[i]; i += 1
        hm_ref = None
        if has_hm:
            hm_ref = scratch[i]; i += 1
        acc_ref = scratch[i]; i += 1

    def _seq_mix():
        # causal depthwise conv: y[i] = sum_k w[k] * x[i-k]; taps are static
        # offset slices of the [halo ; x-tile] buffer (no roll / mask).
        xf = x_ref[0].astype(jnp.float32)                         # (TS, D)
        if K > 1:
            pad_ref[:PAD, :] = halo_ref[0, 0]                     # aligned slab
            pad_ref[PAD:PAD + TS, :] = x_ref[0]
            acc = xf * cw_ref[0, :]
            for k in range(1, K):
                acc = acc + (pad_ref[PAD - k:PAD - k + TS, :]
                             .astype(jnp.float32) * cw_ref[k, :])
        else:
            acc = xf * cw_ref[0, :]
        y = acc + cb_ref[0, :]
        return xf + y * jax.nn.sigmoid(y)                         # SiLU + residual

    def _mlp_chunk(hmat):
        g = jnp.dot(hmat, w1_ref[...], preferred_element_type=jnp.float32)
        # TODO(synk): jax.nn.gelu default is the tanh approximation; PyTorch
        # nn.GELU default is exact erf -- switch approximate=False if the
        # registry cell requires bit-matching.
        g = jax.nn.gelu(g + b1_ref[0, :])                         # (TS, TH) f32
        return jnp.dot(g.astype(w2_ref.dtype), w2_ref[...],
                       preferred_element_type=jnp.float32)        # (TS, D) f32

    if single_h:
        # Weight-resident fast path: everything stays in registers/VMEM values,
        # no h/acc scratch round-trips.
        h = _seq_mix()
        contrib = _mlp_chunk(h.astype(w1_ref.dtype))
        o_ref[0] = (h + contrib + b2_ref[0, :]).astype(o_ref.dtype)
    else:
        @pl.when(h_idx == 0)
        def _store_seq_mix():
            h = _seq_mix()
            h_ref[...] = h
            if has_hm:
                hm_ref[...] = h.astype(hm_ref.dtype)              # hoisted cast

        hmat = hm_ref[...] if has_hm else h_ref[...].astype(w1_ref.dtype)
        contrib = _mlp_chunk(hmat)

        @pl.when(h_idx == 0)
        def _init():
            acc_ref[...] = contrib                                # no zero + RMW

        @pl.when(jnp.logical_and(h_idx > 0, h_idx < n_h - 1))
        def _accumulate():
            acc_ref[...] += contrib

        @pl.when(h_idx == n_h - 1)
        def _finalize():
            out = h_ref[...] + acc_ref[...] + contrib + b2_ref[0, :]
            o_ref[0] = out.astype(o_ref.dtype)


# ---------------------------------------------------------------------------
# Tile selection helpers
# ---------------------------------------------------------------------------
def _vmem_capacity_bytes():
    """Physical VMEM per TensorCore (128 MiB on v5e/v6e, 64 MiB on v7x)."""
    try:
        info = pltpu.get_tpu_info()
        cap = getattr(info, "vmem_capacity_bytes", None)
        if cap:
            return int(cap)
    except Exception:
        pass
    return 64 * 1024 * 1024           # conservative (v7x-sized) fallback


def _tile_candidates(n, prefs, min_val=1):
    """Divisors of n, preferring larger multiples of prefs[0], then prefs[1]...
    n itself is always a legal tile (full-extent block)."""
    out, seen = [], set()
    for m in prefs:
        for d in range(n, 0, -1):
            if n % d == 0 and d % m == 0 and d >= min_val and d not in seen:
                out.append(d)
                seen.add(d)
    if n not in seen and n >= min_val:
        out.insert(0, n)
    return out or [n]


def _vmem_usage(TS, TH, *, D, H, K, PAD, x_isz, w_isz):
    """Double-buffered I/O + weight tiles + small params + scratch, in bytes."""
    n_h = H // TH
    halo_rows = PAD if K > 1 else 1
    u = 2 * TS * D * x_isz                       # x tile (double-buffered)
    u += 2 * halo_rows * D * x_isz               # halo tile
    u += 2 * TS * D * x_isz                      # out tile
    u += 2 * 2 * D * TH * w_isz                  # w1 + w2 tiles (double-buffered)
    u += 2 * (K * D + D + TH + D) * 4            # conv_w/conv_b/b1/b2 (f32, 2-buf)
    if K > 1:
        u += (PAD + TS) * D * x_isz              # pad scratch (input dtype)
    if n_h > 1:
        u += TS * D * 4                          # h scratch (f32)
        u += TS * D * 4                          # acc scratch (f32)
        if w_isz != 4:
            u += TS * D * w_isz                  # hm scratch (matmul dtype)
    return u


# ---------------------------------------------------------------------------
# Wrapper: SequenceBlock forward  ==  hidden_layer(seq_layer(x))
# ---------------------------------------------------------------------------
def sequence_block_forward(x, params, *, seq_tile=None, hid_tile=None):
    B, S, D = x.shape
    conv_w = params["conv_w"].astype(jnp.float32)                 # (K, D)
    conv_b = params["conv_b"].astype(jnp.float32).reshape(1, D)
    w1 = params["w1"]                                              # (D, H)
    w2 = params["w2"]                                              # (H, D)
    H = w1.shape[1]
    b1 = params["b1"].astype(jnp.float32).reshape(1, H)
    b2 = params["b2"].astype(jnp.float32).reshape(1, D)
    K = conv_w.shape[0]

    x_isz = jnp.dtype(x.dtype).itemsize
    w_isz = jnp.dtype(w1.dtype).itemsize
    PAD = 8 * (-(-(K - 1) // 8)) if K > 1 else 0                   # aligned halo rows

    budget = int(0.8 * _vmem_capacity_bytes())                     # ~102 MiB / ~51 MiB
    usage = functools.partial(_vmem_usage, D=D, H=H, K=K, PAD=PAD,
                              x_isz=x_isz, w_isz=w_isz)

    if seq_tile is not None:
        assert S % seq_tile == 0 and seq_tile >= max(K - 1, 1)
        assert seq_tile % 8 == 0 or seq_tile == S
        ts_cands = [seq_tile]
    else:
        ts_cands = _tile_candidates(S, (8,), min_val=max(K - 1, 1))
    if hid_tile is not None:
        assert H % hid_tile == 0
        assert hid_tile % 128 == 0 or hid_tile == H
        th_cands = [hid_tile]
    else:
        th_cands = _tile_candidates(H, (256, 128))

    chosen = None
    # Pass 1 (biggest win): VMEM-resident MLP weights (TH = H, n_h = 1) -> the
    # w1/w2 block index is constant and they are fetched once per call.
    if hid_tile is None or hid_tile == H:
        for ts in ts_cands:
            if usage(ts, H) <= budget:
                chosen = (ts, H)
                break
    # Pass 2: stream weights; maximize TS first (weight BW ∝ 1/TS), then pick
    # the largest MXU-friendly TH.
    if chosen is None:
        for ts in ts_cands:
            for th in th_cands:
                if usage(ts, th) <= budget:
                    chosen = (ts, th)
                    break
            if chosen is not None:
                break
    if chosen is None:                              # nothing fits: smallest tiles
        chosen = (ts_cands[-1], th_cands[-1])
    TS, TH = chosen

    n_s = S // TS
    n_h = H // TH
    single_h = n_h == 1
    has_hm = (jnp.dtype(w1.dtype) != jnp.dtype(jnp.float32)) and (not single_h)

    # Causal halo as an input (instead of a scratch carry): last K-1 raw-x rows
    # of the previous tile, front-padded to PAD rows so the in-kernel store is
    # sublane-aligned.  Removes the serial s-dependence -> s is "parallel".
    halo_rows = PAD if K > 1 else 1
    if K > 1:
        last = x.reshape(B, n_s, TS, D)[:, :, TS - (K - 1):, :]    # (B,n_s,K-1,D)
        prev = jnp.concatenate(
            [jnp.zeros((B, 1, K - 1, D), x.dtype), last[:, :-1]], axis=1)
        halo = jnp.concatenate(
            [jnp.zeros((B, n_s, PAD - (K - 1), D), x.dtype), prev], axis=2)
    else:
        halo = jnp.zeros((B, n_s, halo_rows, D), x.dtype)

    needed = usage(TS, TH)
    vmem_limit = int(min(budget, max(32 * 1024 * 1024, int(1.5 * needed))))
    vmem_limit = max(vmem_limit, int(needed))      # never below the estimate

    weight_bytes = 2 * D * H * w_isz if single_h else B * n_s * 2 * D * H * w_isz
    cost = pl.CostEstimate(
        flops=int(4 * B * S * D * H + 2 * B * S * D * K + 10 * B * S * D),
        transcendentals=int(B * S * (D + H)),
        bytes_accessed=int(2 * B * S * D * x_isz + weight_bytes
                           + B * n_s * halo_rows * D * x_isz
                           + (K * D + 2 * D + H) * 4),
    )

    scratch_shapes = []
    if K > 1:
        scratch_shapes.append(pltpu.VMEM((PAD + TS, D), x.dtype))   # halo + x rows
    if not single_h:
        scratch_shapes.append(pltpu.VMEM((TS, D), jnp.float32))     # seq-mixed h
        if has_hm:
            scratch_shapes.append(pltpu.VMEM((TS, D), w1.dtype))    # h in MXU dtype
        scratch_shapes.append(pltpu.VMEM((TS, D), jnp.float32))     # MLP accumulator

    kernel = functools.partial(_fused_block_kernel, K=K, TS=TS, PAD=PAD,
                               single_h=single_h, has_hm=has_hm)

    return pl.pallas_call(
        kernel,
        out_shape=jax.ShapeDtypeStruct((B, S, D), x.dtype),
        grid_spec=pltpu.PrefetchScalarGridSpec(
            num_scalar_prefetch=0,
            grid=(B, n_s, n_h),
            in_specs=[
                pl.BlockSpec((1, TS, D), lambda b, s, h: (b, s, 0)),            # x
                pl.BlockSpec((1, 1, halo_rows, D), lambda b, s, h: (b, s, 0, 0)),  # halo
                pl.BlockSpec((K, D), lambda b, s, h: (0, 0)),                   # conv_w
                pl.BlockSpec((1, D), lambda b, s, h: (0, 0)),                   # conv_b
                pl.BlockSpec((D, TH), lambda b, s, h: (0, h)),                  # w1
                pl.BlockSpec((1, TH), lambda b, s, h: (0, h)),                  # b1
                pl.BlockSpec((TH, D), lambda b, s, h: (h, 0)),                  # w2
                pl.BlockSpec((1, D), lambda b, s, h: (0, 0)),                   # b2
            ],
            out_specs=pl.BlockSpec((1, TS, D), lambda b, s, h: (b, s, 0)),
            scratch_shapes=scratch_shapes,
        ),
        compiler_params=pltpu.CompilerParams(
            dimension_semantics=("parallel", "parallel", "arbitrary"),
            vmem_limit_bytes=vmem_limit,
        ),
        cost_estimate=cost,
    )(x, halo, conv_w, conv_b, w1, b1, w2, b2)


# ---------------------------------------------------------------------------
# Pure-JAX reference for the sanity check.
# ---------------------------------------------------------------------------
def sequence_block_ref(x, params):
    B, S, D = x.shape
    K = params["conv_w"].shape[0]
    xf = x.astype(jnp.float32)
    acc = jnp.zeros_like(xf)
    for k in range(K):
        shifted = jnp.pad(xf, ((0, 0), (k, 0), (0, 0)))[:, :S, :]
        acc = acc + shifted * params["conv_w"][k].astype(jnp.float32)[None, None, :]
    y = acc + params["conv_b"].astype(jnp.float32).reshape(D)[None, None, :]
    h = xf + y * jax.nn.sigmoid(y)
    m = jnp.einsum("bsd,dh->bsh", h, params["w1"]) + params["b1"].reshape(-1)
    m = jax.nn.gelu(m)
    m = jnp.einsum("bsh,hd->bsd", m, params["w2"]) + params["b2"].reshape(-1)
    return (h + m).astype(x.dtype)


# TODO(synk): decode-time step()/cache path of SequenceBlock is not implemented
# (the registry-driven cell choice is unspecified; this kernel covers forward()).
if __name__ == "__main__":
    # Small, lane-aligned shapes (D, H multiples of 128).
    B, S, D, H, K = 2, 128, 128, 256, 4

    key = jax.random.PRNGKey(0)
    kx, kcw, kcb, kw1, kb1, kw2, kb2 = jax.random.split(key, 7)

    x = jax.random.normal(kx, (B, S, D), jnp.float32)
    params = {
        "conv_w": jax.random.normal(kcw, (K, D), jnp.float32) * 0.2,
        "conv_b": jax.random.normal(kcb, (1, D), jnp.float32) * 0.1,
        "w1": jax.random.normal(kw1, (D, H), jnp.float32) * (1.0 / D ** 0.5),
        "b1": jax.random.normal(kb1, (1, H), jnp.float32) * 0.1,
        "w2": jax.random.normal(kw2, (H, D), jnp.float32) * (1.0 / H ** 0.5),
        "b2": jax.random.normal(kb2, (1, D), jnp.float32) * 0.1,
    }

    ref = sequence_block_ref(x, params)

    # 1) Default tiling: weight-resident (TH=H, n_h=1) fast path.
    out = jax.block_until_ready(sequence_block_forward(x, params))
    assert out.shape == (B, S, D)
    err = float(jnp.max(jnp.abs(out - ref)))
    assert jnp.allclose(out, ref, atol=2e-3, rtol=2e-3), \
        f"resident-weight path mismatch (max abs err {err})"

    # 2) Explicit small tiles: exercises the halo input and the H-chunk
    #    accumulation / finalize path.
    out2 = jax.block_until_ready(
        sequence_block_forward(x, params, seq_tile=64, hid_tile=128))
    err2 = float(jnp.max(jnp.abs(out2 - ref)))
    assert jnp.allclose(out2, ref, atol=2e-3, rtol=2e-3), \
        f"tiled (streamed-weight) path mismatch (max abs err {err2})"

    # 3) bf16 activations + MLP weights (MXU-native path), loose tolerance.
    xb = x.astype(jnp.bfloat16)
    pb = dict(params,
              w1=params["w1"].astype(jnp.bfloat16),
              w2=params["w2"].astype(jnp.bfloat16))
    outb = jax.block_until_ready(sequence_block_forward(xb, pb))
    refb = sequence_block_ref(xb, pb).astype(jnp.float32)
    errb = float(jnp.max(jnp.abs(outb.astype(jnp.float32) - refb)))
    assert jnp.allclose(outb.astype(jnp.float32), refb, atol=2e-1, rtol=5e-2), \
        f"bf16 path mismatch (max abs err {errb})"

    print("KERNEL_OK")
</pallas_src>

<mosaic_0001>
module attributes {stable_mosaic.version = 11 : i64} {
  func.func @_fused_block_kernel(%arg0: i32, %arg1: i32, %arg2: i32, %arg3: memref<1x128x128xf32, #tpu.memory_space<vmem>>, %arg4: memref<1x1x8x128xf32, #tpu.memory_space<vmem>>, %arg5: memref<4x128xf32, #tpu.memory_space<vmem>>, %arg6: memref<1x128xf32, #tpu.memory_space<vmem>>, %arg7: memref<128x256xf32, #tpu.memory_space<vmem>>, %arg8: memref<1x256xf32, #tpu.memory_space<vmem>>, %arg9: memref<256x128xf32, #tpu.memory_space<vmem>>, %arg10: memref<1x128xf32, #tpu.memory_space<vmem>>, %arg11: memref<1x128x128xf32, #tpu.memory_space<vmem>>, %arg12: memref<136x128xf32, #tpu.memory_space<vmem>>) attributes {dimension_semantics = [#tpu.dimension_semantics<parallel>, #tpu.dimension_semantics<parallel>, #tpu.dimension_semantics<arbitrary>], iteration_bounds = array<i64: 2, 1, 1>, scalar_prefetch = 0 : i64, scratch_operands = 1 : i64, tpu.core_type = #tpu.core_type<tc>, window_params = [{transform_indices = @transform_0, window_bounds = array<i64: 1, 128, 128>}, {transform_indices = @transform_1, window_bounds = array<i64: 1, 1, 8, 128>}, {pipeline_mode = #tpu.pipeline_mode<synchronous>, transform_indices = @transform_2, window_bounds = array<i64: 4, 128>}, {pipeline_mode = #tpu.pipeline_mode<synchronous>, transform_indices = @transform_3, window_bounds = array<i64: 1, 128>}, {transform_indices = @transform_4, window_bounds = array<i64: 128, 256>}, {transform_indices = @transform_5, window_bounds = array<i64: 1, 256>}, {transform_indices = @transform_6, window_bounds = array<i64: 256, 128>}, {pipeline_mode = #tpu.pipeline_mode<synchronous>, transform_indices = @transform_7, window_bounds = array<i64: 1, 128>}, {transform_indices = @transform_8, window_bounds = array<i64: 1, 128, 128>}]} {
    %c0 = arith.constant 0 : index
    %c0_0 = arith.constant 0 : index
    %c0_1 = arith.constant 0 : index
    %0 = vector.load %arg3[%c0, %c0_0, %c0_1] : memref<1x128x128xf32, #tpu.memory_space<vmem>>, vector<1x128x128xf32>
    %1 = vector.shape_cast %0 : vector<1x128x128xf32> to vector<128x128xf32>
    %c0_2 = arith.constant 0 : index
    %c0_3 = arith.constant 0 : index
    %c0_4 = arith.constant 0 : index
    %c0_5 = arith.constant 0 : index
    %2 = vector.load %arg4[%c0_2, %c0_3, %c0_4, %c0_5] : memref<1x1x8x128xf32, #tpu.memory_space<vmem>>, vector<1x1x8x128xf32>
    %3 = vector.shape_cast %2 : vector<1x1x8x128xf32> to vector<8x128xf32>
    %c0_6 = arith.constant 0 : index
    %c0_7 = arith.constant 0 : index
    %4 = vector.load %arg12[%c0_6, %c0_7] : memref<136x128xf32, #tpu.memory_space<vmem>>, vector<8x128xf32>
    tpu.vector_store %arg12[%c0_6, %c0_7], %3 {strides = array<i32>} : memref<136x128xf32, #tpu.memory_space<vmem>>, vector<8x128xf32>,
    %c0_8 = arith.constant 0 : index
    %c0_9 = arith.constant 0 : index
    %c0_10 = arith.constant 0 : index
    %5 = vector.load %arg3[%c0_8, %c0_9, %c0_10] : memref<1x128x128xf32, #tpu.memory_space<vmem>>, vector<1x128x128xf32>
    %6 = vector.shape_cast %5 : vector<1x128x128xf32> to vector<128x128xf32>
    %c8 = arith.constant 8 : index
    %c0_11 = arith.constant 0 : index
    %7 = vector.load %arg12[%c8, %c0_11] : memref<136x128xf32, #tpu.memory_space<vmem>>, vector<128x128xf32>
    tpu.vector_store %arg12[%c8, %c0_11], %6 {strides = array<i32>} : memref<136x128xf32, #tpu.memory_space<vmem>>, vector<128x128xf32>,
    %c0_12 = arith.constant 0 : index
    %c0_13 = arith.constant 0 : index
    %8 = vector.load %arg5[%c0_12, %c0_13] : memref<4x128xf32, #tpu.memory_space<vmem>>, vector<1x128xf32>
    %9 = vector.shape_cast %8 : vector<1x128xf32> to vector<128xf32>
    %10 = vector.shape_cast %9 : vector<128xf32> to vector<1x128xf32>
    %11 = vector.broadcast %10 : vector<1x128xf32> to vector<128x128xf32>
    %12 = arith.mulf %1, %11 : vector<128x128xf32>
    %c7 = arith.constant 7 : index
    %c0_14 = arith.constant 0 : index
    %13 = vector.load %arg12[%c7, %c0_14] : memref<136x128xf32, #tpu.memory_space<vmem>>, vector<128x128xf32>
    %c1 = arith.constant 1 : index
    %c0_15 = arith.constant 0 : index
    %14 = vector.load %arg5[%c1, %c0_15] : memref<4x128xf32, #tpu.memory_space<vmem>>, vector<1x128xf32>
    %15 = vector.shape_cast %14 : vector<1x128xf32> to vector<128xf32>
    %16 = vector.shape_cast %15 : vector<128xf32> to vector<1x128xf32>
    %17 = vector.broadcast %16 : vector<1x128xf32> to vector<128x128xf32>
    %18 = arith.mulf %13, %17 : vector<128x128xf32>
    %19 = arith.addf %12, %18 : vector<128x128xf32>
    %c6 = arith.constant 6 : index
    %c0_16 = arith.constant 0 : index
    %20 = vector.load %arg12[%c6, %c0_16] : memref<136x128xf32, #tpu.memory_space<vmem>>, vector<128x128xf32>
    %c2 = arith.constant 2 : index
    %c0_17 = arith.constant 0 : index
    %21 = vector.load %arg5[%c2, %c0_17] : memref<4x128xf32, #tpu.memory_space<vmem>>, vector<1x128xf32>
    %22 = vector.shape_cast %21 : vector<1x128xf32> to vector<128xf32>
    %23 = vector.shape_cast %22 : vector<128xf32> to vector<1x128xf32>
    %24 = vector.broadcast %23 : vector<1x128xf32> to vector<128x128xf32>
    %25 = arith.mulf %20, %24 : vector<128x128xf32>
    %26 = arith.addf %19, %25 : vector<128x128xf32>
    %c5 = arith.constant 5 : index
    %c0_18 = arith.constant 0 : index
    %27 = vector.load %arg12[%c5, %c0_18] : memref<136x128xf32, #tpu.memory_space<vmem>>, vector<128x128xf32>
    %c3 = arith.constant 3 : index
    %c0_19 = arith.constant 0 : index
    %28 = vector.load %arg5[%c3, %c0_19] : memref<4x128xf32, #tpu.memory_space<vmem>>, vector<1x128xf32>
    %29 = vector.shape_cast %28 : vector<1x128xf32> to vector<128xf32>
    %30 = vector.shape_cast %29 : vector<128xf32> to vector<1x128xf32>
    %31 = vector.broadcast %30 : vector<1x128xf32> to vector<128x128xf32>
    %32 = arith.mulf %27, %31 : vector<128x128xf32>
    %33 = arith.addf %26, %32 : vector<128x128xf32>
    %c0_20 = arith.constant 0 : index
    %c0_21 = arith.constant 0 : index
    %34 = vector.load %arg6[%c0_20, %c0_21] : memref<1x128xf32, #tpu.memory_space<vmem>>, vector<1x128xf32>
    %35 = vector.shape_cast %34 : vector<1x128xf32> to vector<128xf32>
    %36 = vector.shape_cast %35 : vector<128xf32> to vector<1x128xf32>
    %37 = vector.broadcast %36 : vector<1x128xf32> to vector<128x128xf32>
    %38 = arith.addf %33, %37 : vector<128x128xf32>
    %39 = arith.negf %38 : vector<128x128xf32>
    %40 = math.exp %39 : vector<128x128xf32>
    %cst = arith.constant 1.000000e+00 : f32
    %41 = vector.broadcast %cst : f32 to vector<128x128xf32>
    %42 = arith.addf %41, %40 : vector<128x128xf32>
    %43 = arith.divf %41, %42 : vector<128x128xf32>
    %44 = arith.mulf %38, %43 : vector<128x128xf32>
    %45 = arith.addf %1, %44 : vector<128x128xf32>
    %c0_22 = arith.constant 0 : index
    %c0_23 = arith.constant 0 : index
    %46 = vector.load %arg7[%c0_22, %c0_23] : memref<128x256xf32, #tpu.memory_space<vmem>>, vector<128x256xf32>
    %cst_24 = arith.constant dense<0.000000e+00> : vector<128x256xf32>
    %47 = tpu.matmul %45, %46, %cst_24 {dimension_numbers = #tpu.dot_dimension_numbers<[1], [0], [0], [1], [0, 0, 1, 1], [], []>} : vector<128x128xf32>, vector<128x256xf32>, vector<128x256xf32> -> vector<128x256xf32>
    %c0_25 = arith.constant 0 : index
    %c0_26 = arith.constant 0 : index
    %48 = vector.load %arg8[%c0_25, %c0_26] : memref<1x256xf32, #tpu.memory_space<vmem>>, vector<1x256xf32>
    %49 = vector.shape_cast %48 : vector<1x256xf32> to vector<256xf32>
    %50 = vector.shape_cast %49 : vector<256xf32> to vector<1x256xf32>
    %51 = vector.broadcast %50 : vector<1x256xf32> to vector<128x256xf32>
    %52 = arith.addf %47, %51 : vector<128x256xf32>
    %53 = arith.mulf %52, %52 : vector<128x256xf32>
    %54 = arith.mulf %52, %53 : vector<128x256xf32>
    %cst_27 = arith.constant 4.471500e-02 : f32
    %55 = vector.broadcast %cst_27 : f32 to vector<128x256xf32>
    %56 = arith.mulf %55, %54 : vector<128x256xf32>
    %57 = arith.addf %52, %56 : vector<128x256xf32>
    %cst_28 = arith.constant 0.797884583 : f32
    %58 = vector.broadcast %cst_28 : f32 to vector<128x256xf32>
    %59 = arith.mulf %58, %57 : vector<128x256xf32>
    %60 = math.tanh %59 : vector<128x256xf32>
    %cst_29 = arith.constant 1.000000e+00 : f32
    %61 = vector.broadcast %cst_29 : f32 to vector<128x256xf32>
    %62 = arith.addf %61, %60 : vector<128x256xf32>
    %cst_30 = arith.constant 5.000000e-01 : f32
    %63 = vector.broadcast %cst_30 : f32 to vector<128x256xf32>
    %64 = arith.mulf %63, %62 : vector<128x256xf32>
    %65 = arith.mulf %52, %64 : vector<128x256xf32>
    %c0_31 = arith.constant 0 : index
    %c0_32 = arith.constant 0 : index
    %66 = vector.load %arg9[%c0_31, %c0_32] : memref<256x128xf32, #tpu.memory_space<vmem>>, vector<256x128xf32>
    %cst_33 = arith.constant dense<0.000000e+00> : vector<128x128xf32>
    %67 = tpu.matmul %65, %66, %cst_33 {dimension_numbers = #tpu.dot_dimension_numbers<[1], [0], [0], [1], [0, 0, 1, 1], [], []>} : vector<128x256xf32>, vector<256x128xf32>, vector<128x128xf32> -> vector<128x128xf32>
    %68 = arith.addf %45, %67 : vector<128x128xf32>
    %c0_34 = arith.constant 0 : index
    %c0_35 = arith.constant 0 : index
    %69 = vector.load %arg10[%c0_34, %c0_35] : memref<1x128xf32, #tpu.memory_space<vmem>>, vector<1x128xf32>
    %70 = vector.shape_cast %69 : vector<1x128xf32> to vector<128xf32>
    %71 = vector.shape_cast %70 : vector<128xf32> to vector<1x128xf32>
    %72 = vector.broadcast %71 : vector<1x128xf32> to vector<128x128xf32>
    %73 = arith.addf %68, %72 : vector<128x128xf32>
    %c0_36 = arith.constant 0 : index
    %c0_37 = arith.constant 0 : index
    %c0_38 = arith.constant 0 : index
    %74 = vector.load %arg11[%c0_36, %c0_37, %c0_38] : memref<1x128x128xf32, #tpu.memory_space<vmem>>, vector<1x128x128xf32>
    %75 = vector.shape_cast %74 : vector<1x128x128xf32> to vector<128x128xf32>
    %76 = vector.shape_cast %73 : vector<128x128xf32> to vector<1x128x128xf32>
    tpu.vector_store %arg11[%c0_36, %c0_37, %c0_38], %76 {strides = array<i32>} : memref<1x128x128xf32, #tpu.memory_space<vmem>>, vector<1x128x128xf32>,
    return
  }
  func.func @transform_0(%arg0: i32, %arg1: i32, %arg2: i32) -> (i32, i32, i32) {
    %c0_i32 = arith.constant 0 : i32
    %c0_i32_0 = arith.constant 0 : i32
    return %arg0, %arg1, %c0_i32 : i32, i32, i32
  }
  func.func @transform_1(%arg0: i32, %arg1: i32, %arg2: i32) -> (i32, i32, i32, i32) {
    %c0_i32 = arith.constant 0 : i32
    %c0_i32_0 = arith.constant 0 : i32
    %c0_i32_1 = arith.constant 0 : i32
    return %arg0, %arg1, %c0_i32, %c0_i32_0 : i32, i32, i32, i32
  }
  func.func @transform_2(%arg0: i32, %arg1: i32, %arg2: i32) -> (i32, i32) {
    %c0_i32 = arith.constant 0 : i32
    %c0_i32_0 = arith.constant 0 : i32
    %c0_i32_1 = arith.constant 0 : i32
    return %c0_i32, %c0_i32_0 : i32, i32
  }
  func.func @transform_3(%arg0: i32, %arg1: i32, %arg2: i32) -> (i32, i32) {
    %c0_i32 = arith.constant 0 : i32
    %c0_i32_0 = arith.constant 0 : i32
    %c0_i32_1 = arith.constant 0 : i32
    return %c0_i32, %c0_i32_0 : i32, i32
  }
  func.func @transform_4(%arg0: i32, %arg1: i32, %arg2: i32) -> (i32, i32) {
    %c0_i32 = arith.constant 0 : i32
    %c0_i32_0 = arith.constant 0 : i32
    return %c0_i32, %arg2 : i32, i32
  }
  func.func @transform_5(%arg0: i32, %arg1: i32, %arg2: i32) -> (i32, i32) {
    %c0_i32 = arith.constant 0 : i32
    %c0_i32_0 = arith.constant 0 : i32
    return %c0_i32, %arg2 : i32, i32
  }
  func.func @transform_6(%arg0: i32, %arg1: i32, %arg2: i32) -> (i32, i32) {
    %c0_i32 = arith.constant 0 : i32
    %c0_i32_0 = arith.constant 0 : i32
    return %arg2, %c0_i32 : i32, i32
  }
  func.func @transform_7(%arg0: i32, %arg1: i32, %arg2: i32) -> (i32, i32) {
    %c0_i32 = arith.constant 0 : i32
    %c0_i32_0 = arith.constant 0 : i32
    %c0_i32_1 = arith.constant 0 : i32
    return %c0_i32, %c0_i32_0 : i32, i32
  }
  func.func @transform_8(%arg0: i32, %arg1: i32, %arg2: i32) -> (i32, i32, i32) {
    %c0_i32 = arith.constant 0 : i32
    %c0_i32_0 = arith.constant 0 : i32
    return %arg0, %arg1, %c0_i32 : i32, i32, i32
  }
}

</mosaic_0001>

<llo_original>
// kernel: tpu_custom_call.1
$region0: #{tpu_custom_call.1}
  #allocation0 [shape = 'u32[]', space=smem, size = 0x4, offset = 0x4, fixed_abs, tag = 'smem constant byte address 0x4 - core index']
  #allocation1 [shape = 'u32[144,128]{1,0:T(1,128)}', space=vmem, size = 0x12000, scoped, tag = 'internal scratch']
  #allocation2 [shape = 'f32[136,128]{1,0:T(8,128)}', space=vmem, size = 0x11000, scoped, tag = 'scratch operand']
  %s0 = inlined_call_operand.hbm [shape: f32[2,128,128], index: 0, kind: input, shape index: {}]
  %s1 = inlined_call_operand.hbm [shape: f32[2,1,8,128], index: 1, kind: input, shape index: {}]
  %s2 = inlined_call_operand.vmem [shape: f32[4,128], index: 2, kind: input, shape index: {}]
  %s3 = inlined_call_operand.vmem [shape: f32[1,128], index: 3, kind: input, shape index: {}]
  %s4 = inlined_call_operand.hbm [shape: f32[128,256], index: 4, kind: input, shape index: {}]
  %s5 = inlined_call_operand.vmem [shape: f32[1,256], index: 5, kind: input, shape index: {}]
  %s6 = inlined_call_operand.hbm [shape: f32[256,128], index: 6, kind: input, shape index: {}]
  %s7 = inlined_call_operand.vmem [shape: f32[1,128], index: 7, kind: input, shape index: {}]
  %s8 = inlined_call_operand.hbm [shape: f32[2,128,128], index: 8, kind: output, shape index: {}]
  %s9 = sld [smem:[#allocation0]]
  $region81: #{tpu_custom_call.1} parent=0
    _
  %s11 = ssub.s32 1, %s9
  %s12 = scalar_select 0, %s11, %s9
  $region1: #{tpu_custom_call.1} parent=0
    #allocation3 [shape = 'u8[131072]{0}', space=vmem, size = 0x20000, scoped, tag = 'input window, operand 0']
    #allocation4 [shape = 's32[2]{0}', space=sflag, size = 0x8, scoped, tag = 'scoped memory for tpu_custom_call.1']
    #allocation5 [shape = 's32[2]{0}', space=sflag, size = 0x8, scoped, tag = 'scoped memory for tpu_custom_call.1']
    #allocation6 [shape = 'u8[8192]{0}', space=vmem, size = 0x2000, scoped, tag = 'input window, operand 1']
    #allocation7 [shape = 's32[2]{0}', space=sflag, size = 0x8, scoped, tag = 'scoped memory for tpu_custom_call.1']
    #allocation8 [shape = 'u8[131072]{0}', space=vmem, size = 0x20000, scoped, tag = 'input window, operand 4, single buffered']
    #allocation9 [shape = 'u8[131072]{0}', space=vmem, size = 0x20000, scoped, tag = 'input window, operand 6, single buffered']
    #allocation10 [shape = 's32[1]{0}', space=sflag, size = 0x4, scoped, tag = 'scoped memory for tpu_custom_call.1']
    #allocation11 [shape = 'u8[131072]{0}', space=vmem, size = 0x20000, scoped, tag = 'output window, operand 0']
    %13 = vsyncpa [#allocation4], 0
    %s14 = scalar_lea.sflag [#allocation4], 1
    %15 = vsyncpa %s14, 0
    %16 = vsyncpa [#allocation7], 0
    %s17 = scalar_lea.sflag [#allocation7], 1
    %18 = vsyncpa %s17, 0
    %19 = vsyncpa [#allocation10], 0
    %20 = vsyncpa [#allocation5], 0
    %s21 = scalar_lea.sflag [#allocation5], 1
    %22 = vsyncpa %s21, 0
    loop: start=0, step=1, limit=4
    $region2: #{tpu_custom_call.1} parent=1 // loop_pre_header
      _
    $region3: #{tpu_custom_call.1} parent=1 // loop_header
      %s24 = sphi 0, %s28
      %p25 = scmp.ge.s32.totalorder %s24, 4
      %s31 = sphi 0, %s50
      %s32 = sphi 0, %s46
      %s33 = sphi 0, %s42
      %s34 = sphi 0, %s31
      %s35 = sphi 0, %s32
      %s36 = sphi 0, %s33
      %s37 = sphi 0, %s34
      %s38 = sphi 0, %s35
      %s39 = sphi 0, %s36
      %s55 = sphi 0, %s57
      %s58 = sphi 0, %s55
      %s59 = sphi 0, %s58
      %s75 = sphi 0, %s59
      %s83 = sphi 0, %s85
      %s86 = sphi 0, %s83
      %s87 = sphi 0, %s86
      %s103 = sphi 0, %s87
      %s107 = sphi 0, %s107
      %s109 = sphi 0, %s107
      %s110 = sphi 0, %s109
      %s124 = sphi 0, %s110
      %s128 = sphi 0, %s128
      %s130 = sphi 0, %s128
      %s131 = sphi 0, %s130
      %s145 = sphi 0, %s131
      %s151 = sphi 0, %s153
      %s154 = sphi 0, %s151
      %s155 = sphi 0, %s154
      %s171 = sphi 0, %s155
      %s177 = sphi 0, %s179
      %s180 = sphi 0, %s177
      %s181 = sphi 0, %s180
      %s197 = sphi 0, %s181
      %s203 = sphi 0, %s205
      %s206 = sphi 0, %s203
      %s207 = sphi 0, %s206
      %s223 = sphi 0, %s207
      %s227 = sphi 0, %s227
      %s229 = sphi 0, %s227
      %s230 = sphi 0, %s229
      %s244 = sphi 0, %s230
      %s252 = sphi 0, %s254
      %s255 = sphi 0, %s252
      %s256 = sphi 0, %s255
      %s272 = sphi 0, %s256
    $region4: #{tpu_custom_call.1} parent=1 // loop_header_branch
      %27 = sbr.rel (%p25) target = $region8
    $region5: #{tpu_custom_call.1} parent=1 // loop_body
      %s29 = ssub.s32 %s24, 1
      %s30 = ssub.s32 %s24, 2
      %s40 = sadd.s32 1, %s33
      %p41 = scmp.ge.s32.totalorder %s40, 1
      %s42 = scalar_select %p41, 0, %s40
      %s43 = sadd.s32 1, %s32
      %s44 = scalar_select %p41, %s43, %s32
      %p45 = scmp.ge.s32.totalorder %s44, 1
      %s46 = scalar_select %p45, 0, %s44
      %s47 = sadd.s32 1, %s31
      %s48 = scalar_select %p45, %s47, %s31
      %p49 = scmp.ge.s32.totalorder %s48, 2
      %s50 = scalar_select %p49, 0, %s48
      %s51 = ssub.s32 %s31, %s50
      %s52 = ssub.s32 %s32, %s46
      %s53 = sor.u32 %s51, %s52
      %p54 = scmp.eq.s32.totalorder %s53, 0
      %s56 = sadd.s32 %s55, 1
      %s57 = scalar_select %p54, %s55, %s56
      %p60 = pneg %p54
      %p61 = scmp.eq.s32.totalorder %s24, 1
      %p62 = por %p60, %p61
      %p63 = scmp.ne.s32.totalorder %s55, %s58
      %p64 = scmp.eq.s32.totalorder %s24, 0
      %p65 = por %p63, %p64
      %p66 = scmp.ne.s32.totalorder %s55, %s58
      %p67 = scmp.eq.s32.totalorder %s29, 1
      %p68 = por %p66, %p67
      %p69 = scmp.ne.s32.totalorder %s58, %s59
      %p70 = scmp.eq.s32.totalorder %s29, 0
      %p71 = por %p69, %p70
      %p72 = scmp.ne.s32.totalorder %s58, %s59
      %p73 = scmp.eq.s32.totalorder %s30, 1
      %p74 = por %p72, %p73
      %p76 = scmp.ne.s32.totalorder %s59, %s75
      %p77 = scmp.eq.s32.totalorder %s30, 0
      %p78 = por %p76, %p77
      %s79 = ssub.s32 %s31, %s50
      %s80 = ssub.s32 %s32, %s46
      %s81 = sor.u32 %s79, %s80
      %p82 = scmp.eq.s32.totalorder %s81, 0
      %s84 = sadd.s32 %s83, 1
      %s85 = scalar_select %p82, %s83, %s84
      %p88 = pneg %p82
      %p89 = scmp.eq.s32.totalorder %s24, 1
      %p90 = por %p88, %p89
      %p91 = scmp.ne.s32.totalorder %s83, %s86
      %p92 = scmp.eq.s32.totalorder %s24, 0
      %p93 = por %p91, %p92
      %p94 = scmp.ne.s32.totalorder %s83, %s86
      %p95 = scmp.eq.s32.totalorder %s29, 1
      %p96 = por %p94, %p95
      %p97 = scmp.ne.s32.totalorder %s86, %s87
      %p98 = scmp.eq.s32.totalorder %s29, 0
      %p99 = por %p97, %p98
      %p100 = scmp.ne.s32.totalorder %s86, %s87
      %p101 = scmp.eq.s32.totalorder %s30, 1
      %p102 = por %p100, %p101
      %p104 = scmp.ne.s32.totalorder %s87, %s103
      %p105 = scmp.eq.s32.totalorder %s30, 0
      %p106 = por %p104, %p105
      %s108 = sadd.s32 %s107, 1
      %p111 = scmp.eq.s32.totalorder %s24, 1
      %p112 = scmp.ne.s32.totalorder %s107, %s109
      %p113 = scmp.eq.s32.totalorder %s24, 0
      %p114 = por %p112, %p113
      %p115 = scmp.ne.s32.totalorder %s107, %s109
      %p116 = scmp.eq.s32.totalorder %s29, 1
      %p117 = por %p115, %p116
      %p118 = scmp.ne.s32.totalorder %s109, %s110
      %p119 = scmp.eq.s32.totalorder %s29, 0
      %p120 = por %p118, %p119
      %p121 = scmp.ne.s32.totalorder %s109, %s110
      %p122 = scmp.eq.s32.totalorder %s30, 1
      %p123 = por %p121, %p122
      %p125 = scmp.ne.s32.totalorder %s110, %s124
      %p126 = scmp.eq.s32.totalorder %s30, 0
      %p127 = por %p125, %p126
      %s129 = sadd.s32 %s128, 1
      %p132 = scmp.eq.s32.totalorder %s24, 1
      %p133 = scmp.ne.s32.totalorder %s128, %s130
      %p134 = scmp.eq.s32.totalorder %s24, 0
      %p135 = por %p133, %p134
      %p136 = scmp.ne.s32.totalorder %s128, %s130
      %p137 = scmp.eq.s32.totalorder %s29, 1
      %p138 = por %p136, %p137
      %p139 = scmp.ne.s32.totalorder %s130, %s131
      %p140 = scmp.eq.s32.totalorder %s29, 0
      %p141 = por %p139, %p140
      %p142 = scmp.ne.s32.totalorder %s130, %s131
      %p143 = scmp.eq.s32.totalorder %s30, 1
      %p144 = por %p142, %p143
      %p146 = scmp.ne.s32.totalorder %s131, %s145
      %p147 = scmp.eq.s32.totalorder %s30, 0
      %p148 = por %p146, %p147
      %s149 = ssub.s32 %s33, %s42
      %p150 = scmp.eq.s32.totalorder %s149, 0
      %s152 = sadd.s32 %s151, 1
      %s153 = scalar_select %p150, %s151, %s152
      %p156 = pneg %p150
      %p157 = scmp.eq.s32.totalorder %s24, 1
      %p158 = por %p156, %p157
      %p159 = scmp.ne.s32.totalorder %s151, %s154
      %p160 = scmp.eq.s32.totalorder %s24, 0
      %p161 = por %p159, %p160
      %p162 = scmp.ne.s32.totalorder %s151, %s154
      %p163 = scmp.eq.s32.totalorder %s29, 1
      %p164 = por %p162, %p163
      %p165 = scmp.ne.s32.totalorder %s154, %s155
      %p166 = scmp.eq.s32.totalorder %s29, 0
      %p167 = por %p165, %p166
      %p168 = scmp.ne.s32.totalorder %s154, %s155
      %p169 = scmp.eq.s32.totalorder %s30, 1
      %p170 = por %p168, %p169
      %p172 = scmp.ne.s32.totalorder %s155, %s171
      %p173 = scmp.eq.s32.totalorder %s30, 0
      %p174 = por %p172, %p173
      %s175 = ssub.s32 %s33, %s42
      %p176 = scmp.eq.s32.totalorder %s175, 0
      %s178 = sadd.s32 %s177, 1
      %s179 = scalar_select %p176, %s177, %s178
      %p182 = pneg %p176
      %p183 = scmp.eq.s32.totalorder %s24, 1
      %p184 = por %p182, %p183
      %p185 = scmp.ne.s32.totalorder %s177, %s180
      %p186 = scmp.eq.s32.totalorder %s24, 0
      %p187 = por %p185, %p186
      %p188 = scmp.ne.s32.totalorder %s177, %s180
      %p189 = scmp.eq.s32.totalorder %s29, 1
      %p190 = por %p188, %p189
      %p191 = scmp.ne.s32.totalorder %s180, %s181
      %p192 = scmp.eq.s32.totalorder %s29, 0
      %p193 = por %p191, %p192
      %p194 = scmp.ne.s32.totalorder %s180, %s181
      %p195 = scmp.eq.s32.totalorder %s30, 1
      %p196 = por %p194, %p195
      %p198 = scmp.ne.s32.totalorder %s181, %s197
      %p199 = scmp.eq.s32.totalorder %s30, 0
      %p200 = por %p198, %p199
      %s201 = ssub.s32 %s33, %s42
      %p202 = scmp.eq.s32.totalorder %s201, 0
      %s204 = sadd.s32 %s203, 1
      %s205 = scalar_select %p202, %s203, %s204
      %p208 = pneg %p202
      %p209 = scmp.eq.s32.totalorder %s24, 1
      %p210 = por %p208, %p209
      %p211 = scmp.ne.s32.totalorder %s203, %s206
      %p212 = scmp.eq.s32.totalorder %s24, 0
      %p213 = por %p211, %p212
      %p214 = scmp.ne.s32.totalorder %s203, %s206
      %p215 = scmp.eq.s32.totalorder %s29, 1
      %p216 = por %p214, %p215
      %p217 = scmp.ne.s32.totalorder %s206, %s207
      %p218 = scmp.eq.s32.totalorder %s29, 0
      %p219 = por %p217, %p218
      %p220 = scmp.ne.s32.totalorder %s206, %s207
      %p221 = scmp.eq.s32.totalorder %s30, 1
      %p222 = por %p220, %p221
      %p224 = scmp.ne.s32.totalorder %s207, %s223
      %p225 = scmp.eq.s32.totalorder %s30, 0
      %p226 = por %p224, %p225
      %s228 = sadd.s32 %s227, 1
      %p231 = scmp.eq.s32.totalorder %s24, 1
      %p232 = scmp.ne.s32.totalorder %s227, %s229
      %p233 = scmp.eq.s32.totalorder %s24, 0
      %p234 = por %p232, %p233
      %p235 = scmp.ne.s32.totalorder %s227, %s229
      %p236 = scmp.eq.s32.totalorder %s29, 1
      %p237 = por %p235, %p236
      %p238 = scmp.ne.s32.totalorder %s229, %s230
      %p239 = scmp.eq.s32.totalorder %s29, 0
      %p240 = por %p238, %p239
      %p241 = scmp.ne.s32.totalorder %s229, %s230
      %p242 = scmp.eq.s32.totalorder %s30, 1
      %p243 = por %p241, %p242
      %p245 = scmp.ne.s32.totalorder %s230, %s244
      %p246 = scmp.eq.s32.totalorder %s30, 0
      %p247 = por %p245, %p246
      %s248 = ssub.s32 %s31, %s50
      %s249 = ssub.s32 %s32, %s46
      %s250 = sor.u32 %s248, %s249
      %p251 = scmp.eq.s32.totalorder %s250, 0
      %s253 = sadd.s32 %s252, 1
      %s254 = scalar_select %p251, %s252, %s253
      %p257 = pneg %p251
      %p258 = scmp.eq.s32.totalorder %s24, 1
      %p259 = por %p257, %p258
      %p260 = scmp.ne.s32.totalorder %s252, %s255
      %p261 = scmp.eq.s32.totalorder %s24, 0
      %p262 = por %p260, %p261
      %p263 = scmp.ne.s32.totalorder %s252, %s255
      %p264 = scmp.eq.s32.totalorder %s29, 1
      %p265 = por %p263, %p264
      %p266 = scmp.ne.s32.totalorder %s255, %s256
      %p267 = scmp.eq.s32.totalorder %s29, 0
      %p268 = por %p266, %p267
      %p269 = scmp.ne.s32.totalorder %s255, %s256
      %p270 = scmp.eq.s32.totalorder %s30, 1
      %p271 = por %p269, %p270
      %p273 = scmp.ne.s32.totalorder %s256, %s272
      %p274 = scmp.eq.s32.totalorder %s30, 0
      %p275 = por %p273, %p274
      %p276 = scmp.le.s32.totalorder 1, %s24
      %p277 = scmp.lt.s32.totalorder %s24, 3
      %p278 = pnand %p276, %p277
      %p279 = pneg %p278
      // Predicated region
      $region9: #{tpu_custom_call.1} parent=5 // pred_check
        _
      $region10: #{tpu_custom_call.1} parent=5 // pred_check_branch
        %281 = sbr.rel (%p278) target = $region12
      $region11: #{tpu_custom_call.1} parent=5 // pred_region
        %s282 = ssub.s32 %s24, 1
        // Predicated region
        $region13: #{tpu_custom_call.1} parent=11 // pred_check
          %p283 = pneg %p120
        $region14: #{tpu_custom_call.1} parent=11 // pred_check_branch
          %285 = sbr.rel (%p283) target = $region16
        $region15: #{tpu_custom_call.1} parent=11 // pred_region
          _
        $region16: #{tpu_custom_call.1} parent=11 // pred_fallthru
          _
        // Predicated region
        $region17: #{tpu_custom_call.1} parent=11 // pred_check
          %p286 = pneg %p141
        $region18: #{tpu_custom_call.1} parent=11 // pred_check_branch
          %288 = sbr.rel (%p286) target = $region20
        $region19: #{tpu_custom_call.1} parent=11 // pred_region
          _
        $region20: #{tpu_custom_call.1} parent=11 // pred_fallthru
          _
        // Predicated region
        $region21: #{tpu_custom_call.1} parent=11 // pred_check
          %p289 = pneg %p167
        $region22: #{tpu_custom_call.1} parent=11 // pred_check_branch
          %291 = sbr.rel (%p289) target = $region24
        $region23: #{tpu_custom_call.1} parent=11 // pred_region
          %s292 = smul.u32 2, %s36
          %s294 = ssub.s32 4096, 4096
          %295 = vsyncadd [#allocation7], %s294
          %s296 = smul.addr %s292, 128
          %s297 = scalar_lea.hbm %s4, %s296
          %s298 = sshll.u32 [#allocation8], 4
          %s299 = int_to_ptr.vmem [resolvable:$true] %s298
          %304 = dma.hbm_to_vmem [thread:$0]  %s297, 4096, %s299, [#allocation7], 256, 256, 16
        $region24: #{tpu_custom_call.1} parent=11 // pred_fallthru
          _
        // Predicated region
        $region25: #{tpu_custom_call.1} parent=11 // pred_check
          %p305 = pneg %p193
        $region26: #{tpu_custom_call.1} parent=11 // pred_check_branch
          %307 = sbr.rel (%p305) target = $region28
        $region27: #{tpu_custom_call.1} parent=11 // pred_region
          %s308 = smul.u32 2, %s36
          %p309 = scmp.lt.s32.totalorder %s308, 1
          %s310 = scalar_select %p309, %s308, 1
          %s311 = scalar_lea.vmem %s5, %s310
          %s312 = smul.u32 2, %s36
        $region28: #{tpu_custom_call.1} parent=11 // pred_fallthru
          _
        // Predicated region
        $region29: #{tpu_custom_call.1} parent=11 // pred_check
          %p313 = pneg %p219
        $region30: #{tpu_custom_call.1} parent=11 // pred_check_branch
          %315 = sbr.rel (%p313) target = $region32
        $region31: #{tpu_custom_call.1} parent=11 // pred_region
          %s316 = smul.u32 32, %s36
          %s318 = ssub.s32 4096, 4096
          %319 = vsyncadd [#allocation10], %s318
          %s320 = smul.addr %s316, 128
          %s321 = scalar_lea.hbm %s6, %s320
          %s322 = sshll.u32 [#allocation9], 4
          %s323 = int_to_ptr.vmem [resolvable:$true] %s322
          %328 = dma.hbm_to_vmem [thread:$0]  %s321, 4096, %s323, [#allocation10], 128, 128, 8
        $region32: #{tpu_custom_call.1} parent=11 // pred_fallthru
          _
        // Predicated region
        $region33: #{tpu_custom_call.1} parent=11 // pred_check
          %p329 = pneg %p240
        $region34: #{tpu_custom_call.1} parent=11 // pred_check_branch
          %331 = sbr.rel (%p329) target = $region36
        $region35: #{tpu_custom_call.1} parent=11 // pred_region
          _
        $region36: #{tpu_custom_call.1} parent=11 // pred_fallthru
          _
      $region12: #{tpu_custom_call.1} parent=5 // pred_fallthru
        _
      %p332 = scmp.lt.s32.totalorder %s24, 2
      // Predicated region
      $region37: #{tpu_custom_call.1} parent=5 // pred_check
        %p333 = pneg %p332
      $region38: #{tpu_custom_call.1} parent=5 // pred_check_branch
        %335 = sbr.rel (%p333) target = $region40
      $region39: #{tpu_custom_call.1} parent=5 // pred_region
        // Predicated region
        $region41: #{tpu_custom_call.1} parent=39 // pred_check
          %p336 = pneg %p65
        $region42: #{tpu_custom_call.1} parent=39 // pred_check_branch
          %338 = sbr.rel (%p336) target = $region44
        $region43: #{tpu_custom_call.1} parent=39 // pred_region
          %s339 = sand.u32 %s55, 1
          %s340 = scalar_lea.sflag [#allocation4], %s339
          %s341 = sand.u32 %s55, 1
          %s342 = smul.addr %s341, 128
          %s343 = scalar_lea.vmem [#allocation3], %s342
          %s344 = smul.u32 16, %s32
          %s346 = ssub.s32 2048, 2048
          %347 = vsyncadd %s340, %s346
          %s348 = smul.addr %s31, 16
          %s349 = sadd.s32 %s344, %s348
          %s350 = smul.addr %s349, 128
          %s351 = scalar_lea.hbm %s0, %s350
          %s352 = sshll.u32 %s343, 4
          %s353 = int_to_ptr.vmem [resolvable:$true] %s352
          %358 = dma.hbm_to_vmem [thread:$0]  %s351, 2048, %s353, %s340, 128, 128, 8
        $region44: #{tpu_custom_call.1} parent=39 // pred_fallthru
          _
        // Predicated region
        $region45: #{tpu_custom_call.1} parent=39 // pred_check
          %p359 = pneg %p93
        $region46: #{tpu_custom_call.1} parent=39 // pred_check_branch
          %361 = sbr.rel (%p359) target = $region48
        $region47: #{tpu_custom_call.1} parent=39 // pred_region
          %s362 = sand.u32 %s24, 1
          %s363 = scalar_lea.sflag [#allocation7], %s362
          %s364 = sand.u32 %s83, 1
          %s365 = smul.addr %s364, 8
          %s366 = scalar_lea.vmem [#allocation6], %s365
          %s368 = ssub.s32 128, 128
          %369 = vsyncadd %s363, %s368
          %s370 = sadd.s32 %s32, %s31
          %s371 = smul.addr %s370, 128
          %s372 = scalar_lea.hbm %s1, %s371
          %s374 = sshll.u32 %s366, 4
          %s375 = int_to_ptr.vmem [resolvable:$true] %s374
          %377 = dma.hbm_to_vmem [thread:$0]  %s372, 128, %s375, %s363
        $region48: #{tpu_custom_call.1} parent=39 // pred_fallthru
          _
      $region40: #{tpu_custom_call.1} parent=5 // pred_fallthru
        _
      %p378 = scmp.le.s32.totalorder 1, %s24
      %p379 = scmp.lt.s32.totalorder %s24, 3
      %p380 = pnand %p378, %p379
      %p381 = pneg %p380
      // Predicated region
      $region49: #{tpu_custom_call.1} parent=5 // pred_check
        _
      $region50: #{tpu_custom_call.1} parent=5 // pred_check_branch
        %383 = sbr.rel (%p380) target = $region52
      $region51: #{tpu_custom_call.1} parent=5 // pred_region
        %s384 = ssub.s32 %s24, 1
        %s385 = sand.u32 %s58, 1
        %s386 = scalar_lea.sflag [#allocation4], %s385
        %s387 = sand.u32 %s58, 1
        %s388 = smul.addr %s387, 128
        %s389 = scalar_lea.vmem [#allocation3], %s388
        // Predicated region
        $region53: #{tpu_custom_call.1} parent=51 // pred_check
          %p390 = pneg %p71
        $region54: #{tpu_custom_call.1} parent=51 // pred_check_branch
          %392 = sbr.rel (%p390) target = $region56
        $region55: #{tpu_custom_call.1} parent=51 // pred_region
          %393 = dma.done %s386, 2048
        $region56: #{tpu_custom_call.1} parent=51 // pred_fallthru
          _
        %s394 = sand.u32 %s29, 1
        %s395 = scalar_lea.sflag [#allocation7], %s394
        %s396 = sand.u32 %s86, 1
        %s397 = smul.addr %s396, 8
        %s398 = scalar_lea.vmem [#allocation6], %s397
        // Predicated region
        $region57: #{tpu_custom_call.1} parent=51 // pred_check
          %p399 = pneg %p99
        $region58: #{tpu_custom_call.1} parent=51 // pred_check_branch
          %401 = sbr.rel (%p399) target = $region60
        $region59: #{tpu_custom_call.1} parent=51 // pred_region
          %402 = dma.done %s395, 128
        $region60: #{tpu_custom_call.1} parent=51 // pred_fallthru
          _
        // Predicated region
        $region61: #{tpu_custom_call.1} parent=51 // pred_check
          %p403 = pneg %p167
        $region62: #{tpu_custom_call.1} parent=51 // pred_check_branch
          %405 = sbr.rel (%p403) target = $region64
        $region63: #{tpu_custom_call.1} parent=51 // pred_region
          %406 = dma.done [#allocation7], 4096
        $region64: #{tpu_custom_call.1} parent=51 // pred_fallthru
          _
        // Predicated region
        $region65: #{tpu_custom_call.1} parent=51 // pred_check
          %p407 = pneg %p219
        $region66: #{tpu_custom_call.1} parent=51 // pred_check_branch
          %409 = sbr.rel (%p407) target = $region68
        $region67: #{tpu_custom_call.1} parent=51 // pred_region
          %410 = dma.done [#allocation10], 4096
        $region68: #{tpu_custom_call.1} parent=51 // pred_fallthru
          _
        %s411 = sand.u32 %s58, 1
        %s412 = scalar_lea.sflag [#allocation4], %s411
        %s413 = sand.u32 %s58, 1
        %s414 = smul.addr %s413, 128
        %s415 = scalar_lea.vmem [#allocation3], %s414
        %p416 = pneg %p71
        %p417 = pneg %p68
        %s418 = sand.u32 %s29, 1
        %s419 = scalar_lea.sflag [#allocation7], %s418
        %s420 = sand.u32 %s86, 1
        %s421 = smul.addr %s420, 8
        %s422 = scalar_lea.vmem [#allocation6], %s421
        %p423 = pneg %p99
        %p424 = pneg %p96
        %p425 = pneg %p120
        %p426 = pneg %p117
        %p427 = pneg %p141
        %p428 = pneg %p138
        %p429 = pneg %p167
        %p430 = pneg %p164
        %s431 = smul.u32 2, %s36
        %p432 = scmp.lt.s32.totalorder %s431, 1
        %s433 = scalar_select %p432, %s431, 1
        %s434 = scalar_lea.vmem %s5, %s433
        %p435 = pneg %p193
        %p436 = pneg %p190
        %p437 = pneg %p219
        %p438 = pneg %p216
        %p439 = pneg %p240
        %p440 = pneg %p237
        %p441 = pneg %p268
        %p442 = pneg %p265
        %s443 = sand.u32 %s255, 1
        %s444 = scalar_lea.sflag [#allocation5], %s443
        %s445 = sand.u32 %s255, 1
        %s446 = smul.addr %s445, 128
        %s447 = scalar_lea.vmem [#allocation11], %s446
        %s448 = smul.u32 16, %s35
        %s449 = smul.u32 2, %s36
        %s450 = smul.u32 2, %s36
        %p451 = scmp.lt.s32.totalorder %s450, 1
        %s452 = scalar_select %p451, %s450, 1
        %s453 = scalar_lea.vmem %s5, %s452
        %s454 = smul.u32 2, %s36
        %s455 = smul.u32 32, %s36
        %s456 = smul.u32 16, %s35
        %v457 = vld [vmem:[%s389] sm:$0xff]
        %v458 = vld [vmem:[%s389 + $0x8] sm:$0xff]
        %v459 = vld [vmem:[%s389 + $0x10] sm:$0xff]
        %v460 = vld [vmem:[%s389 + $0x18] sm:$0xff]
        %v461 = vld [vmem:[%s389 + $0x20] sm:$0xff]
        %v462 = vld [vmem:[%s389 + $0x28] sm:$0xff]
        %v463 = vld [vmem:[%s389 + $0x30] sm:$0xff]
        %v464 = vld [vmem:[%s389 + $0x38] sm:$0xff]
        %v465 = vld [vmem:[%s389 + $0x40] sm:$0xff]
        %v466 = vld [vmem:[%s389 + $0x48] sm:$0xff]
        %v467 = vld [vmem:[%s389 + $0x50] sm:$0xff]
        %v468 = vld [vmem:[%s389 + $0x58] sm:$0xff]
        %v469 = vld [vmem:[%s389 + $0x60] sm:$0xff]
        %v470 = vld [vmem:[%s389 + $0x68] sm:$0xff]
        %v471 = vld [vmem:[%s389 + $0x70] sm:$0xff]
        %v472 = vld [vmem:[%s389 + $0x78] sm:$0xff]
        %v473 = vld [vmem:[%s398] sm:$0xff]
        %474 = vst [vmem:[#allocation2] sm:$0xff] %v473
        %v475 = vld [vmem:[%s389] sm:$0xff]
        %v476 = vld [vmem:[%s389 + $0x8] sm:$0xff]
        %v477 = vld [vmem:[%s389 + $0x10] sm:$0xff]
        %v478 = vld [vmem:[%s389 + $0x18] sm:$0xff]
        %v479 = vld [vmem:[%s389 + $0x20] sm:$0xff]
        %v480 = vld [vmem:[%s389 + $0x28] sm:$0xff]
        %v481 = vld [vmem:[%s389 + $0x30] sm:$0xff]
        %v482 = vld [vmem:[%s389 + $0x38] sm:$0xff]
        %v483 = vld [vmem:[%s389 + $0x40] sm:$0xff]
        %v484 = vld [vmem:[%s389 + $0x48] sm:$0xff]
        %v485 = vld [vmem:[%s389 + $0x50] sm:$0xff]
        %v486 = vld [vmem:[%s389 + $0x58] sm:$0xff]
        %v487 = vld [vmem:[%s389 + $0x60] sm:$0xff]
        %v488 = vld [vmem:[%s389 + $0x68] sm:$0xff]
        %v489 = vld [vmem:[%s389 + $0x70] sm:$0xff]
        %v490 = vld [vmem:[%s389 + $0x78] sm:$0xff]
        %491 = vst [vmem:[#allocation2 + $0x8] sm:$0xff] %v475
        %492 = vst [vmem:[#allocation2 + $0x10] sm:$0xff] %v476
        %493 = vst [vmem:[#allocation2 + $0x18] sm:$0xff] %v477
        %494 = vst [vmem:[#allocation2 + $0x20] sm:$0xff] %v478
        %495 = vst [vmem:[#allocation2 + $0x28] sm:$0xff] %v479
        %496 = vst [vmem:[#allocation2 + $0x30] sm:$0xff] %v480
        %497 = vst [vmem:[#allocation2 + $0x38] sm:$0xff] %v481
        %498 = vst [vmem:[#allocation2 + $0x40] sm:$0xff] %v482
        %499 = vst [vmem:[#allocation2 + $0x48] sm:$0xff] %v483
        %500 = vst [vmem:[#allocation2 + $0x50] sm:$0xff] %v484
        %501 = vst [vmem:[#allocation2 + $0x58] sm:$0xff] %v485
        %502 = vst [vmem:[#allocation2 + $0x60] sm:$0xff] %v486
        %503 = vst [vmem:[#allocation2 + $0x68] sm:$0xff] %v487
        %504 = vst [vmem:[#allocation2 + $0x70] sm:$0xff] %v488
        %505 = vst [vmem:[#allocation2 + $0x78] sm:$0xff] %v489
        %506 = vst [vmem:[#allocation2 + $0x80] sm:$0xff] %v490
        %v507 = vld [vmem:[%s2] sm:$0x1]
        %v508 = vlaneseq
        %v509 = vshrl.u32 %v508, 7
        %v510 = vsub.s32 0, %v509
        %v511 = vrot.slane %v507, %v510
        %v512 = vmul.f32 %v457, %v511
        %v513 = vmul.f32 %v458, %v511
        %v514 = vmul.f32 %v459, %v511
        %v515 = vmul.f32 %v460, %v511
        %v516 = vmul.f32 %v461, %v511
        %v517 = vmul.f32 %v462, %v511
        %v518 = vmul.f32 %v463, %v511
        %v519 = vmul.f32 %v464, %v511
        %v520 = vmul.f32 %v465, %v511
        %v521 = vmul.f32 %v466, %v511
        %v522 = vmul.f32 %v467, %v511
        %v523 = vmul.f32 %v468, %v511
        %v524 = vmul.f32 %v469, %v511
        %v525 = vmul.f32 %v470, %v511
        %v526 = vmul.f32 %v471, %v511
        %v527 = vmul.f32 %v472, %v511
        %v528 = vld [vmem:[#allocation2 + $0x7] sm:$0xff]
        %v529 = vld [vmem:[#allocation2 + $0xf] sm:$0xff]
        %v530 = vld [vmem:[#allocation2 + $0x17] sm:$0xff]
        %v531 = vld [vmem:[#allocation2 + $0x1f] sm:$0xff]
        %v532 = vld [vmem:[#allocation2 + $0x27] sm:$0xff]
        %v533 = vld [vmem:[#allocation2 + $0x2f] sm:$0xff]
        %v534 = vld [vmem:[#allocation2 + $0x37] sm:$0xff]
        %v535 = vld [vmem:[#allocation2 + $0x3f] sm:$0xff]
        %v536 = vld [vmem:[#allocation2 + $0x47] sm:$0xff]
        %v537 = vld [vmem:[#allocation2 + $0x4f] sm:$0xff]
        %v538 = vld [vmem:[#allocation2 + $0x57] sm:$0xff]
        %v539 = vld [vmem:[#allocation2 + $0x5f] sm:$0xff]
        %v540 = vld [vmem:[#allocation2 + $0x67] sm:$0xff]
        %v541 = vld [vmem:[#allocation2 + $0x6f] sm:$0xff]
        %v542 = vld [vmem:[#allocation2 + $0x77] sm:$0xff]
        %v543 = vld [vmem:[#allocation2 + $0x7f] sm:$0xff]
        %v544 = vld [vmem:[%s2 + $0x1] sm:$0x1]
        %v545 = vlaneseq
        %v546 = vshrl.u32 %v545, 7
        %v547 = vsub.s32 0, %v546
        %v548 = vrot.slane %v544, %v547
        %v549 = vmul.f32 %v528, %v548
        %v550 = vmul.f32 %v529, %v548
        %v551 = vmul.f32 %v530, %v548
        %v552 = vmul.f32 %v531, %v548
        %v553 = vmul.f32 %v532, %v548
        %v554 = vmul.f32 %v533, %v548
        %v555 = vmul.f32 %v534, %v548
        %v556 = vmul.f32 %v535, %v548
        %v557 = vmul.f32 %v536, %v548
        %v558 = vmul.f32 %v537, %v548
        %v559 = vmul.f32 %v538, %v548
        %v560 = vmul.f32 %v539, %v548
        %v561 = vmul.f32 %v540, %v548
        %v562 = vmul.f32 %v541, %v548
        %v563 = vmul.f32 %v542, %v548
        %v564 = vmul.f32 %v543, %v548
        %v565 = vadd.f32 %v512, %v549
        %v566 = vadd.f32 %v513, %v550
        %v567 = vadd.f32 %v514, %v551
        %v568 = vadd.f32 %v515, %v552
        %v569 = vadd.f32 %v516, %v553
        %v570 = vadd.f32 %v517, %v554
        %v571 = vadd.f32 %v518, %v555
        %v572 = vadd.f32 %v519, %v556
        %v573 = vadd.f32 %v520, %v557
        %v574 = vadd.f32 %v521, %v558
        %v575 = vadd.f32 %v522, %v559
        %v576 = vadd.f32 %v523, %v560
        %v577 = vadd.f32 %v524, %v561
        %v578 = vadd.f32 %v525, %v562
        %v579 = vadd.f32 %v526, %v563
        %v580 = vadd.f32 %v527, %v564
        %v581 = vld [vmem:[#allocation2 + $0x6] sm:$0xff]
        %v582 = vld [vmem:[#allocation2 + $0xe] sm:$0xff]
        %v583 = vld [vmem:[#allocation2 + $0x16] sm:$0xff]
        %v584 = vld [vmem:[#allocation2 + $0x1e] sm:$0xff]
        %v585 = vld [vmem:[#allocation2 + $0x26] sm:$0xff]
        %v586 = vld [vmem:[#allocation2 + $0x2e] sm:$0xff]
        %v587 = vld [vmem:[#allocation2 + $0x36] sm:$0xff]
        %v588 = vld [vmem:[#allocation2 + $0x3e] sm:$0xff]
        %v589 = vld [vmem:[#allocation2 + $0x46] sm:$0xff]
        %v590 = vld [vmem:[#allocation2 + $0x4e] sm:$0xff]
        %v591 = vld [vmem:[#allocation2 + $0x56] sm:$0xff]
        %v592 = vld [vmem:[#allocation2 + $0x5e] sm:$0xff]
        %v593 = vld [vmem:[#allocation2 + $0x66] sm:$0xff]
        %v594 = vld [vmem:[#allocation2 + $0x6e] sm:$0xff]
        %v595 = vld [vmem:[#allocation2 + $0x76] sm:$0xff]
        %v596 = vld [vmem:[#allocation2 + $0x7e] sm:$0xff]
        %v597 = vld [vmem:[%s2 + $0x2] sm:$0x1]
        %v598 = vlaneseq
        %v599 = vshrl.u32 %v598, 7
        %v600 = vsub.s32 0, %v599
        %v601 = vrot.slane %v597, %v600
        %v602 = vmul.f32 %v581, %v601
        %v603 = vmul.f32 %v582, %v601
        %v604 = vmul.f32 %v583, %v601
        %v605 = vmul.f32 %v584, %v601
        %v606 = vmul.f32 %v585, %v601
        %v607 = vmul.f32 %v586, %v601
        %v608 = vmul.f32 %v587, %v601
        %v609 = vmul.f32 %v588, %v601
        %v610 = vmul.f32 %v589, %v601
        %v611 = vmul.f32 %v590, %v601
        %v612 = vmul.f32 %v591, %v601
        %v613 = vmul.f32 %v592, %v601
        %v614 = vmul.f32 %v593, %v601
        %v615 = vmul.f32 %v594, %v601
        %v616 = vmul.f32 %v595, %v601
        %v617 = vmul.f32 %v596, %v601
        %v618 = vadd.f32 %v565, %v602
        %v619 = vadd.f32 %v566, %v603
        %v620 = vadd.f32 %v567, %v604
        %v621 = vadd.f32 %v568, %v605
        %v622 = vadd.f32 %v569, %v606
        %v623 = vadd.f32 %v570, %v607
        %v624 = vadd.f32 %v571, %v608
        %v625 = vadd.f32 %v572, %v609
        %v626 = vadd.f32 %v573, %v610
        %v627 = vadd.f32 %v574, %v611
        %v628 = vadd.f32 %v575, %v612
        %v629 = vadd.f32 %v576, %v613
        %v630 = vadd.f32 %v577, %v614
        %v631 = vadd.f32 %v578, %v615
        %v632 = vadd.f32 %v579, %v616
        %v633 = vadd.f32 %v580, %v617
        %v634 = vld [vmem:[#allocation2 + $0x5] sm:$0xff]
        %v635 = vld [vmem:[#allocation2 + $0xd] sm:$0xff]
        %v636 = vld [vmem:[#allocation2 + $0x15] sm:$0xff]
        %v637 = vld [vmem:[#allocation2 + $0x1d] sm:$0xff]
        %v638 = vld [vmem:[#allocation2 + $0x25] sm:$0xff]
        %v639 = vld [vmem:[#allocation2 + $0x2d] sm:$0xff]
        %v640 = vld [vmem:[#allocation2 + $0x35] sm:$0xff]
        %v641 = vld [vmem:[#allocation2 + $0x3d] sm:$0xff]
        %v642 = vld [vmem:[#allocation2 + $0x45] sm:$0xff]
        %v643 = vld [vmem:[#allocation2 + $0x4d] sm:$0xff]
        %v644 = vld [vmem:[#allocation2 + $0x55] sm:$0xff]
        %v645 = vld [vmem:[#allocation2 + $0x5d] sm:$0xff]
        %v646 = vld [vmem:[#allocation2 + $0x65] sm:$0xff]
        %v647 = vld [vmem:[#allocation2 + $0x6d] sm:$0xff]
        %v648 = vld [vmem:[#allocation2 + $0x75] sm:$0xff]
        %v649 = vld [vmem:[#allocation2 + $0x7d] sm:$0xff]
        %v650 = vld [vmem:[%s2 + $0x3] sm:$0x1]
        %v651 = vlaneseq
        %v652 = vshrl.u32 %v651, 7
        %v653 = vsub.s32 0, %v652
        %v654 = vrot.slane %v650, %v653
        %v655 = vmul.f32 %v634, %v654
        %v656 = vmul.f32 %v635, %v654
        %v657 = vmul.f32 %v636, %v654
        %v658 = vmul.f32 %v637, %v654
        %v659 = vmul.f32 %v638, %v654
        %v660 = vmul.f32 %v639, %v654
        %v661 = vmul.f32 %v640, %v654
        %v662 = vmul.f32 %v641, %v654
        %v663 = vmul.f32 %v642, %v654
        %v664 = vmul.f32 %v643, %v654
        %v665 = vmul.f32 %v644, %v654
        %v666 = vmul.f32 %v645, %v654
        %v667 = vmul.f32 %v646, %v654
        %v668 = vmul.f32 %v647, %v654
        %v669 = vmul.f32 %v648, %v654
        %v670 = vmul.f32 %v649, %v654
        %v671 = vadd.f32 %v618, %v655
        %v672 = vadd.f32 %v619, %v656
        %v673 = vadd.f32 %v620, %v657
        %v674 = vadd.f32 %v621, %v658
        %v675 = vadd.f32 %v622, %v659
        %v676 = vadd.f32 %v623, %v660
        %v677 = vadd.f32 %v624, %v661
        %v678 = vadd.f32 %v625, %v662
        %v679 = vadd.f32 %v626, %v663
        %v680 = vadd.f32 %v627, %v664
        %v681 = vadd.f32 %v628, %v665
        %v682 = vadd.f32 %v629, %v666
        %v683 = vadd.f32 %v630, %v667
        %v684 = vadd.f32 %v631, %v668
        %v685 = vadd.f32 %v632, %v669
        %v686 = vadd.f32 %v633, %v670
        %v687 = vld [vmem:[%s3] sm:$0x1]
        %v689 = vlaneseq
        %v690 = vshrl.u32 %v689, 7
        %v691 = vsub.s32 0, %v690
        %v692 = vrot.slane %v687, %v691
        %v694 = vadd.f32 %v671, %v692
        %v695 = vadd.f32 %v672, %v692
        %v696 = vadd.f32 %v673, %v692
        %v697 = vadd.f32 %v674, %v692
        %v698 = vadd.f32 %v675, %v692
        %v699 = vadd.f32 %v676, %v692
        %v700 = vadd.f32 %v677, %v692
        %v701 = vadd.f32 %v678, %v692
        %v702 = vadd.f32 %v679, %v692
        %v703 = vadd.f32 %v680, %v692
        %v704 = vadd.f32 %v681, %v692
        %v705 = vadd.f32 %v682, %v692
        %v706 = vadd.f32 %v683, %v692
        %v707 = vadd.f32 %v684, %v692
        %v708 = vadd.f32 %v685, %v692
        %v709 = vadd.f32 %v686, %v692
        %v710 = vxor.u32 %v694, 2147483648
        %v711 = vxor.u32 %v695, 2147483648
        %v712 = vxor.u32 %v696, 2147483648
        %v713 = vxor.u32 %v697, 2147483648
        %v714 = vxor.u32 %v698, 2147483648
        %v715 = vxor.u32 %v699, 2147483648
        %v716 = vxor.u32 %v700, 2147483648
        %v717 = vxor.u32 %v701, 2147483648
        %v718 = vxor.u32 %v702, 2147483648
        %v719 = vxor.u32 %v703, 2147483648
        %v720 = vxor.u32 %v704, 2147483648
        %v721 = vxor.u32 %v705, 2147483648
        %v722 = vxor.u32 %v706, 2147483648
        %v723 = vxor.u32 %v707, 2147483648
        %v724 = vxor.u32 %v708, 2147483648
        %v725 = vxor.u32 %v709, 2147483648
        %v726 = vmul.f32 %v710, 1.442695
        %v727 = vpow.pop %v726
        %v728 = vmul.f32 %v711, 1.442695
        %v729 = vpow.pop %v728
        %v730 = vmul.f32 %v712, 1.442695
        %v731 = vpow.pop %v730
        %v732 = vmul.f32 %v713, 1.442695
        %v733 = vpow.pop %v732
        %v734 = vmul.f32 %v714, 1.442695
        %v735 = vpow.pop %v734
        %v736 = vmul.f32 %v715, 1.442695
        %v737 = vpow.pop %v736
        %v738 = vmul.f32 %v716, 1.442695
        %v739 = vpow.pop %v738
        %v740 = vmul.f32 %v717, 1.442695
        %v741 = vpow.pop %v740
        %v742 = vmul.f32 %v718, 1.442695
        %v743 = vpow.pop %v742
        %v744 = vmul.f32 %v719, 1.442695
        %v745 = vpow.pop %v744
        %v746 = vmul.f32 %v720, 1.442695
        %v747 = vpow.pop %v746
        %v748 = vmul.f32 %v721, 1.442695
        %v749 = vpow.pop %v748
        %v750 = vmul.f32 %v722, 1.442695
        %v751 = vpow.pop %v750
        %v752 = vmul.f32 %v723, 1.442695
        %v753 = vpow.pop %v752
        %v754 = vmul.f32 %v724, 1.442695
        %v755 = vpow.pop %v754
        %v756 = vmul.f32 %v725, 1.442695
        %v757 = vpow.pop %v756
        %v758 = vadd.f32 %v727, 1.0
        %v759 = vadd.f32 %v729, 1.0
        %v760 = vadd.f32 %v731, 1.0
        %v761 = vadd.f32 %v733, 1.0
        %v762 = vadd.f32 %v735, 1.0
        %v763 = vadd.f32 %v737, 1.0
        %v764 = vadd.f32 %v739, 1.0
        %v765 = vadd.f32 %v741, 1.0
        %v766 = vadd.f32 %v743, 1.0
        %v767 = vadd.f32 %v745, 1.0
        %v768 = vadd.f32 %v747, 1.0
        %v769 = vadd.f32 %v749, 1.0
        %v770 = vadd.f32 %v751, 1.0
        %v771 = vadd.f32 %v753, 1.0
        %v772 = vadd.f32 %v755, 1.0
        %v773 = vadd.f32 %v757, 1.0
        %v774 = vrcp.pop %v758
        %v775 = vmul.f32 1.0, %v774
        %v776 = vrcp.pop %v759
        %v777 = vmul.f32 1.0, %v776
        %v778 = vrcp.pop %v760
        %v779 = vmul.f32 1.0, %v778
        %v780 = vrcp.pop %v761
        %v781 = vmul.f32 1.0, %v780
        %v782 = vrcp.pop %v762
        %v783 = vmul.f32 1.0, %v782
        %v784 = vrcp.pop %v763
        %v785 = vmul.f32 1.0, %v784
        %v786 = vrcp.pop %v764
        %v787 = vmul.f32 1.0, %v786
        %v788 = vrcp.pop %v765
        %v789 = vmul.f32 1.0, %v788
        %v790 = vrcp.pop %v766
        %v791 = vmul.f32 1.0, %v790
        %v792 = vrcp.pop %v767
        %v793 = vmul.f32 1.0, %v792
        %v794 = vrcp.pop %v768
        %v795 = vmul.f32 1.0, %v794
        %v796 = vrcp.pop %v769
        %v797 = vmul.f32 1.0, %v796
        %v798 = vrcp.pop %v770
        %v799 = vmul.f32 1.0, %v798
        %v800 = vrcp.pop %v771
        %v801 = vmul.f32 1.0, %v800
        %v802 = vrcp.pop %v772
        %v803 = vmul.f32 1.0, %v802
        %v804 = vrcp.pop %v773
        %v805 = vmul.f32 1.0, %v804
        %v806 = vmul.f32 %v694, %v775
        %v807 = vmul.f32 %v695, %v777
        %v808 = vmul.f32 %v696, %v779
        %v809 = vmul.f32 %v697, %v781
        %v810 = vmul.f32 %v698, %v783
        %v811 = vmul.f32 %v699, %v785
        %v812 = vmul.f32 %v700, %v787
        %v813 = vmul.f32 %v701, %v789
        %v814 = vmul.f32 %v702, %v791
        %v815 = vmul.f32 %v703, %v793
        %v816 = vmul.f32 %v704, %v795
        %v817 = vmul.f32 %v705, %v797
        %v818 = vmul.f32 %v706, %v799
        %v819 = vmul.f32 %v707, %v801
        %v820 = vmul.f32 %v708, %v803
        %v821 = vmul.f32 %v709, %v805
        %v822 = vadd.f32 %v457, %v806
        %v823 = vadd.f32 %v458, %v807
        %v824 = vadd.f32 %v459, %v808
        %v825 = vadd.f32 %v460, %v809
        %v826 = vadd.f32 %v461, %v810
        %v827 = vadd.f32 %v462, %v811
        %v828 = vadd.f32 %v463, %v812
        %v829 = vadd.f32 %v464, %v813
        %v830 = vadd.f32 %v465, %v814
        %v831 = vadd.f32 %v466, %v815
        %v832 = vadd.f32 %v467, %v816
        %v833 = vadd.f32 %v468, %v817
        %v834 = vadd.f32 %v469, %v818
        %v835 = vadd.f32 %v470, %v819
        %v836 = vadd.f32 %v471, %v820
        %v837 = vadd.f32 %v472, %v821
        %v838 = vld [vmem:[#allocation8] sm:$0xff]
        %v839 = vld [vmem:[#allocation8 + $0x8] sm:$0xff]
        %v840 = vld [vmem:[#allocation8 + $0x10] sm:$0xff]
        %v841 = vld [vmem:[#allocation8 + $0x18] sm:$0xff]
        %v842 = vld [vmem:[#allocation8 + $0x20] sm:$0xff]
        %v843 = vld [vmem:[#allocation8 + $0x28] sm:$0xff]
        %v844 = vld [vmem:[#allocation8 + $0x30] sm:$0xff]
        %v845 = vld [vmem:[#allocation8 + $0x38] sm:$0xff]
        %v846 = vld [vmem:[#allocation8 + $0x40] sm:$0xff]
        %v847 = vld [vmem:[#allocation8 + $0x48] sm:$0xff]
        %v848 = vld [vmem:[#allocation8 + $0x50] sm:$0xff]
        %v849 = vld [vmem:[#allocation8 + $0x58] sm:$0xff]
        %v850 = vld [vmem:[#allocation8 + $0x60] sm:$0xff]
        %v851 = vld [vmem:[#allocation8 + $0x68] sm:$0xff]
        %v852 = vld [vmem:[#allocation8 + $0x70] sm:$0xff]
        %v853 = vld [vmem:[#allocation8 + $0x78] sm:$0xff]
        %v854 = vld [vmem:[#allocation8 + $0x80] sm:$0xff]
        %v855 = vld [vmem:[#allocation8 + $0x88] sm:$0xff]
        %v856 = vld [vmem:[#allocation8 + $0x90] sm:$0xff]
        %v857 = vld [vmem:[#allocation8 + $0x98] sm:$0xff]
        %v858 = vld [vmem:[#allocation8 + $0xa0] sm:$0xff]
        %v859 = vld [vmem:[#allocation8 + $0xa8] sm:$0xff]
        %v860 = vld [vmem:[#allocation8 + $0xb0] sm:$0xff]
        %v861 = vld [vmem:[#allocation8 + $0xb8] sm:$0xff]
        %v862 = vld [vmem:[#allocation8 + $0xc0] sm:$0xff]
        %v863 = vld [vmem:[#allocation8 + $0xc8] sm:$0xff]
        %v864 = vld [vmem:[#allocation8 + $0xd0] sm:$0xff]
        %v865 = vld [vmem:[#allocation8 + $0xd8] sm:$0xff]
        %v866 = vld [vmem:[#allocation8 + $0xe0] sm:$0xff]
        %v867 = vld [vmem:[#allocation8 + $0xe8] sm:$0xff]
        %v868 = vld [vmem:[#allocation8 + $0xf0] sm:$0xff]
        %v869 = vld [vmem:[#allocation8 + $0xf8] sm:$0xff]
        %v870 = vld [vmem:[%s453] sm:$0x3]
        %v872 = vlaneseq
        %v873 = vshrl.u32 %v872, 7
        %v874 = vsub.s32 0, %v873
        %v875 = vrot.slane %v870, %v874
        %v876 = vlaneseq
        %v877 = vshrl.u32 %v876, 7
        %v878 = vsub.s32 1, %v877
        %v879 = vrot.slane %v870, %v878
        %882 = vmatprep.subr.mxu0 %v839
        %883 = vmatpush1.msra.mxu0 %v838
        %884 = vmatprep.subr.mxu0 %v841
        %885 = vmatpush1.msra.mxu0 %v840
        %886 = vmatprep.subr.mxu0 %v843
        %887 = vmatpush1.msra.mxu0 %v842
        %888 = vmatprep.subr.mxu0 %v845
        %889 = vmatpush1.msra.mxu0 %v844
        %890 = vmatprep.subr.mxu0 %v847
        %891 = vmatpush1.msra.mxu0 %v846
        %892 = vmatprep.subr.mxu0 %v849
        %893 = vmatpush1.msra.mxu0 %v848
        %894 = vmatprep.subr.mxu0 %v851
        %895 = vmatpush1.msra.mxu0 %v850
        %896 = vmatprep.subr.mxu0 %v853
        %897 = vmatpush1.msra.mxu0 %v852
        %898 = vmatprep.subr.mxu0 %v855
        %899 = vmatpush1.msra.mxu0 %v854
        %900 = vmatprep.subr.mxu0 %v857
        %901 = vmatpush1.msra.mxu0 %v856
        %902 = vmatprep.subr.mxu0 %v859
        %903 = vmatpush1.msra.mxu0 %v858
        %904 = vmatprep.subr.mxu0 %v861
        %905 = vmatpush1.msra.mxu0 %v860
        %906 = vmatprep.subr.mxu0 %v863
        %907 = vmatpush1.msra.mxu0 %v862
        %908 = vmatprep.subr.mxu0 %v865
        %909 = vmatpush1.msra.mxu0 %v864
        %910 = vmatprep.subr.mxu0 %v867
        %911 = vmatpush1.msra.mxu0 %v866
        %912 = vmatprep.subr.mxu0 %v869
        %913 = vmatpush1.msra.mxu0 %v868
        %914 = vmatprep.subr.mxu0 0.0
        %915 = vmatpush1.msra.mxu0 0.0
        %916 = vmatprep.subr.mxu0 0.0
        %917 = vmatpush1.msra.mxu0 0.0
        %918 = vmatprep.subr.mxu0 0.0
        %919 = vmatpush1.msra.mxu0 0.0
        %920 = vmatprep.subr.mxu0 0.0
        %921 = vmatpush1.msra.mxu0 0.0
        %922 = vmatprep.subr.mxu0 0.0
        %923 = vmatpush1.msra.mxu0 0.0
        %924 = vmatprep.subr.mxu0 0.0
        %925 = vmatpush1.msra.mxu0 0.0
        %926 = vmatprep.subr.mxu0 0.0
        %927 = vmatpush1.msra.mxu0 0.0
        %928 = vmatprep.subr.mxu0 0.0
        %929 = vmatpush1.msra.mxu0 0.0
        %930 = vmatprep.subr.mxu0 0.0
        %931 = vmatpush1.msra.mxu0 0.0
        %932 = vmatprep.subr.mxu0 0.0
        %933 = vmatpush1.msra.mxu0 0.0
        %934 = vmatprep.subr.mxu0 0.0
        %935 = vmatpush1.msra.mxu0 0.0
        %936 = vmatprep.subr.mxu0 0.0
        %937 = vmatpush1.msra.mxu0 0.0
        %938 = vmatprep.subr.mxu0 0.0
        %939 = vmatpush1.msra.mxu0 0.0
        %940 = vmatprep.subr.mxu0 0.0
        %941 = vmatpush1.msra.mxu0 0.0
        %942 = vmatprep.subr.mxu0 0.0
        %943 = vmatpush1.msra.mxu0 0.0
        %944 = vmatprep.subr.mxu0 0.0
        %945 = vmatpush1.msra.mxu0 0.0
        %946 = vmatprep.mubr.f32.mxu0 0.0
        %947 = vmatmul.mubr.f32.gmra.mrb[0].mxu0 %v822
        %v948 = vpop.f32.mrb[0].mxu0
        %v949 = vadd.f32 %v875, %v948
        %v950 = vpop.f32.mrb[0].mxu0
        %v951 = vadd.f32 %v879, %v950
        %952 = vmatprep.mubr.f32.mxu0 0.0
        %953 = vmatmul.mubr.f32.gmra.mrb[0].mxu0 %v823
        %v954 = vpop.f32.mrb[0].mxu0
        %v955 = vadd.f32 %v875, %v954
        %v956 = vpop.f32.mrb[0].mxu0
        %v957 = vadd.f32 %v879, %v956
        %958 = vmatprep.mubr.f32.mxu0 0.0
        %959 = vmatmul.mubr.f32.gmra.mrb[0].mxu0 %v824
        %v960 = vpop.f32.mrb[0].mxu0
        %v961 = vadd.f32 %v875, %v960
        %v962 = vpop.f32.mrb[0].mxu0
        %v963 = vadd.f32 %v879, %v962
        %964 = vmatprep.mubr.f32.mxu0 0.0
        %965 = vmatmul.mubr.f32.gmra.mrb[0].mxu0 %v825
        %v966 = vpop.f32.mrb[0].mxu0
        %v967 = vadd.f32 %v875, %v966
        %v968 = vpop.f32.mrb[0].mxu0
        %v969 = vadd.f32 %v879, %v968
        %970 = vmatprep.mubr.f32.mxu0 0.0
        %971 = vmatmul.mubr.f32.gmra.mrb[0].mxu0 %v826
        %v972 = vpop.f32.mrb[0].mxu0
        %v973 = vadd.f32 %v875, %v972
        %v974 = vpop.f32.mrb[0].mxu0
        %v975 = vadd.f32 %v879, %v974
        %976 = vmatprep.mubr.f32.mxu0 0.0
        %977 = vmatmul.mubr.f32.gmra.mrb[0].mxu0 %v827
        %v978 = vpop.f32.mrb[0].mxu0
        %v979 = vadd.f32 %v875, %v978
        %v980 = vpop.f32.mrb[0].mxu0
        %v981 = vadd.f32 %v879, %v980
        %982 = vmatprep.mubr.f32.mxu0 0.0
        %983 = vmatmul.mubr.f32.gmra.mrb[0].mxu0 %v828
        %v984 = vpop.f32.mrb[0].mxu0
        %v985 = vadd.f32 %v875, %v984
        %v986 = vpop.f32.mrb[0].mxu0
        %v987 = vadd.f32 %v879, %v986
        %988 = vmatprep.mubr.f32.mxu0 0.0
        %989 = vmatmul.mubr.f32.gmra.mrb[0].mxu0 %v829
        %v990 = vpop.f32.mrb[0].mxu0
        %v991 = vadd.f32 %v875, %v990
        %v992 = vpop.f32.mrb[0].mxu0
        %v993 = vadd.f32 %v879, %v992
        %994 = vmatprep.mubr.f32.mxu0 0.0
        %995 = vmatmul.mubr.f32.gmra.mrb[0].mxu0 %v830
        %v996 = vpop.f32.mrb[0].mxu0
        %v997 = vadd.f32 %v875, %v996
        %v998 = vpop.f32.mrb[0].mxu0
        %v999 = vadd.f32 %v879, %v998
        %1000 = vmatprep.mubr.f32.mxu0 0.0
        %1001 = vmatmul.mubr.f32.gmra.mrb[0].mxu0 %v831
        %v1002 = vpop.f32.mrb[0].mxu0
        %v1003 = vadd.f32 %v875, %v1002
        %v1004 = vpop.f32.mrb[0].mxu0
        %v1005 = vadd.f32 %v879, %v1004
        %1006 = vmatprep.mubr.f32.mxu0 0.0
        %1007 = vmatmul.mubr.f32.gmra.mrb[0].mxu0 %v832
        %v1008 = vpop.f32.mrb[0].mxu0
        %v1009 = vadd.f32 %v875, %v1008
        %v1010 = vpop.f32.mrb[0].mxu0
        %v1011 = vadd.f32 %v879, %v1010
        %1012 = vmatprep.mubr.f32.mxu0 0.0
        %1013 = vmatmul.mubr.f32.gmra.mrb[0].mxu0 %v833
        %v1014 = vpop.f32.mrb[0].mxu0
        %v1015 = vadd.f32 %v875, %v1014
        %v1016 = vpop.f32.mrb[0].mxu0
        %v1017 = vadd.f32 %v879, %v1016
        %1018 = vmatprep.mubr.f32.mxu0 0.0
        %1019 = vmatmul.mubr.f32.gmra.mrb[0].mxu0 %v834
        %v1020 = vpop.f32.mrb[0].mxu0
        %v1021 = vadd.f32 %v875, %v1020
        %v1022 = vpop.f32.mrb[0].mxu0
        %v1023 = vadd.f32 %v879, %v1022
        %1024 = vmatprep.mubr.f32.mxu0 0.0
        %1025 = vmatmul.mubr.f32.gmra.mrb[0].mxu0 %v835
        %v1026 = vpop.f32.mrb[0].mxu0
        %v1027 = vadd.f32 %v875, %v1026
        %v1028 = vpop.f32.mrb[0].mxu0
        %v1029 = vadd.f32 %v879, %v1028
        %1030 = vmatprep.mubr.f32.mxu0 0.0
        %1031 = vmatmul.mubr.f32.gmra.mrb[0].mxu0 %v836
        %v1032 = vpop.f32.mrb[0].mxu0
        %v1033 = vadd.f32 %v875, %v1032
        %v1034 = vpop.f32.mrb[0].mxu0
        %v1035 = vadd.f32 %v879, %v1034
        %1036 = vmatprep.mubr.f32.mxu0 0.0
        %1037 = vmatmul.mubr.f32.gmra.mrb[0].mxu0 %v837
        %v1038 = vpop.f32.mrb[0].mxu0
        %v1039 = vadd.f32 %v875, %v1038
        %v1040 = vpop.f32.mrb[0].mxu0
        %v1041 = vadd.f32 %v879, %v1040
        %1042 = vdwg.mxu0
        %v1043 = vmul.f32 %v949, %v949
        %v1044 = vmul.f32 %v951, %v951
        %v1045 = vmul.f32 %v955, %v955
        %v1046 = vmul.f32 %v957, %v957
        %v1047 = vmul.f32 %v961, %v961
        %v1048 = vmul.f32 %v963, %v963
        %v1049 = vmul.f32 %v967, %v967
        %v1050 = vmul.f32 %v969, %v969
        %v1051 = vmul.f32 %v973, %v973
        %v1052 = vmul.f32 %v975, %v975
        %v1053 = vmul.f32 %v979, %v979
        %v1054 = vmul.f32 %v981, %v981
        %v1055 = vmul.f32 %v985, %v985
        %v1056 = vmul.f32 %v987, %v987
        %v1057 = vmul.f32 %v991, %v991
        %v1058 = vmul.f32 %v993, %v993
        %v1059 = vmul.f32 %v997, %v997
        %v1060 = vmul.f32 %v999, %v999
        %v1061 = vmul.f32 %v1003, %v1003
        %v1062 = vmul.f32 %v1005, %v1005
        %v1063 = vmul.f32 %v1009, %v1009
        %v1064 = vmul.f32 %v1011, %v1011
        %v1065 = vmul.f32 %v1015, %v1015
        %v1066 = vmul.f32 %v1017, %v1017
        %v1067 = vmul.f32 %v1021, %v1021
        %v1068 = vmul.f32 %v1023, %v1023
        %v1069 = vmul.f32 %v1027, %v1027
        %v1070 = vmul.f32 %v1029, %v1029
        %v1071 = vmul.f32 %v1033, %v1033
        %v1072 = vmul.f32 %v1035, %v1035
        %v1073 = vmul.f32 %v1039, %v1039
        %v1074 = vmul.f32 %v1041, %v1041
        %v1075 = vmul.f32 %v949, %v1043
        %v1076 = vmul.f32 %v951, %v1044
        %v1077 = vmul.f32 %v955, %v1045
        %v1078 = vmul.f32 %v957, %v1046
        %v1079 = vmul.f32 %v961, %v1047
        %v1080 = vmul.f32 %v963, %v1048
        %v1081 = vmul.f32 %v967, %v1049
        %v1082 = vmul.f32 %v969, %v1050
        %v1083 = vmul.f32 %v973, %v1051
        %v1084 = vmul.f32 %v975, %v1052
        %v1085 = vmul.f32 %v979, %v1053
        %v1086 = vmul.f32 %v981, %v1054
        %v1087 = vmul.f32 %v985, %v1055
        %v1088 = vmul.f32 %v987, %v1056
        %v1089 = vmul.f32 %v991, %v1057
        %v1090 = vmul.f32 %v993, %v1058
        %v1091 = vmul.f32 %v997, %v1059
        %v1092 = vmul.f32 %v999, %v1060
        %v1093 = vmul.f32 %v1003, %v1061
        %v1094 = vmul.f32 %v1005, %v1062
        %v1095 = vmul.f32 %v1009, %v1063
        %v1096 = vmul.f32 %v1011, %v1064
        %v1097 = vmul.f32 %v1015, %v1065
        %v1098 = vmul.f32 %v1017, %v1066
        %v1099 = vmul.f32 %v1021, %v1067
        %v1100 = vmul.f32 %v1023, %v1068
        %v1101 = vmul.f32 %v1027, %v1069
        %v1102 = vmul.f32 %v1029, %v1070
        %v1103 = vmul.f32 %v1033, %v1071
        %v1104 = vmul.f32 %v1035, %v1072
        %v1105 = vmul.f32 %v1039, %v1073
        %v1106 = vmul.f32 %v1041, %v1074
        %v1107 = vmul.f32 %v1075, 0.044715
        %v1108 = vmul.f32 %v1076, 0.044715
        %v1109 = vmul.f32 %v1077, 0.044715
        %v1110 = vmul.f32 %v1078, 0.044715
        %v1111 = vmul.f32 %v1079, 0.044715
        %v1112 = vmul.f32 %v1080, 0.044715
        %v1113 = vmul.f32 %v1081, 0.044715
        %v1114 = vmul.f32 %v1082, 0.044715
        %v1115 = vmul.f32 %v1083, 0.044715
        %v1116 = vmul.f32 %v1084, 0.044715
        %v1117 = vmul.f32 %v1085, 0.044715
        %v1118 = vmul.f32 %v1086, 0.044715
        %v1119 = vmul.f32 %v1087, 0.044715
        %v1120 = vmul.f32 %v1088, 0.044715
        %v1121 = vmul.f32 %v1089, 0.044715
        %v1122 = vmul.f32 %v1090, 0.044715
        %v1123 = vmul.f32 %v1091, 0.044715
        %v1124 = vmul.f32 %v1092, 0.044715
        %v1125 = vmul.f32 %v1093, 0.044715
        %v1126 = vmul.f32 %v1094, 0.044715
        %v1127 = vmul.f32 %v1095, 0.044715
        %v1128 = vmul.f32 %v1096, 0.044715
        %v1129 = vmul.f32 %v1097, 0.044715
        %v1130 = vmul.f32 %v1098, 0.044715
        %v1131 = vmul.f32 %v1099, 0.044715
        %v1132 = vmul.f32 %v1100, 0.044715
        %v1133 = vmul.f32 %v1101, 0.044715
        %v1134 = vmul.f32 %v1102, 0.044715
        %v1135 = vmul.f32 %v1103, 0.044715
        %v1136 = vmul.f32 %v1104, 0.044715
        %v1137 = vmul.f32 %v1105, 0.044715
        %v1138 = vmul.f32 %v1106, 0.044715
        %v1139 = vadd.f32 %v949, %v1107
        %v1140 = vadd.f32 %v951, %v1108
        %v1141 = vadd.f32 %v955, %v1109
        %v1142 = vadd.f32 %v957, %v1110
        %v1143 = vadd.f32 %v961, %v1111
        %v1144 = vadd.f32 %v963, %v1112
        %v1145 = vadd.f32 %v967, %v1113
        %v1146 = vadd.f32 %v969, %v1114
        %v1147 = vadd.f32 %v973, %v1115
        %v1148 = vadd.f32 %v975, %v1116
        %v1149 = vadd.f32 %v979, %v1117
        %v1150 = vadd.f32 %v981, %v1118
        %v1151 = vadd.f32 %v985, %v1119
        %v1152 = vadd.f32 %v987, %v1120
        %v1153 = vadd.f32 %v991, %v1121
        %v1154 = vadd.f32 %v993, %v1122
        %v1155 = vadd.f32 %v997, %v1123
        %v1156 = vadd.f32 %v999, %v1124
        %v1157 = vadd.f32 %v1003, %v1125
        %v1158 = vadd.f32 %v1005, %v1126
        %v1159 = vadd.f32 %v1009, %v1127
        %v1160 = vadd.f32 %v1011, %v1128
        %v1161 = vadd.f32 %v1015, %v1129
        %v1162 = vadd.f32 %v1017, %v1130
        %v1163 = vadd.f32 %v1021, %v1131
        %v1164 = vadd.f32 %v1023, %v1132
        %v1165 = vadd.f32 %v1027, %v1133
        %v1166 = vadd.f32 %v1029, %v1134
        %v1167 = vadd.f32 %v1033, %v1135
        %v1168 = vadd.f32 %v1035, %v1136
        %v1169 = vadd.f32 %v1039, %v1137
        %v1170 = vadd.f32 %v1041, %v1138
        %v1171 = vmul.f32 %v1139, 0.7978846
        %v1172 = vmul.f32 %v1140, 0.7978846
        %v1173 = vmul.f32 %v1141, 0.7978846
        %v1174 = vmul.f32 %v1142, 0.7978846
        %v1175 = vmul.f32 %v1143, 0.7978846
        %v1176 = vmul.f32 %v1144, 0.7978846
        %v1177 = vmul.f32 %v1145, 0.7978846
        %v1178 = vmul.f32 %v1146, 0.7978846
        %v1179 = vmul.f32 %v1147, 0.7978846
        %v1180 = vmul.f32 %v1148, 0.7978846
        %v1181 = vmul.f32 %v1149, 0.7978846
        %v1182 = vmul.f32 %v1150, 0.7978846
        %v1183 = vmul.f32 %v1151, 0.7978846
        %v1184 = vmul.f32 %v1152, 0.7978846
        %v1185 = vmul.f32 %v1153, 0.7978846
        %v1186 = vmul.f32 %v1154, 0.7978846
        %v1187 = vmul.f32 %v1155, 0.7978846
        %v1188 = vmul.f32 %v1156, 0.7978846
        %v1189 = vmul.f32 %v1157, 0.7978846
        %v1190 = vmul.f32 %v1158, 0.7978846
        %v1191 = vmul.f32 %v1159, 0.7978846
        %v1192 = vmul.f32 %v1160, 0.7978846
        %v1193 = vmul.f32 %v1161, 0.7978846
        %v1194 = vmul.f32 %v1162, 0.7978846
        %v1195 = vmul.f32 %v1163, 0.7978846
        %v1196 = vmul.f32 %v1164, 0.7978846
        %v1197 = vmul.f32 %v1165, 0.7978846
        %v1198 = vmul.f32 %v1166, 0.7978846
        %v1199 = vmul.f32 %v1167, 0.7978846
        %v1200 = vmul.f32 %v1168, 0.7978846
        %v1201 = vmul.f32 %v1169, 0.7978846
        %v1202 = vmul.f32 %v1170, 0.7978846
        %v1203 = vtanh.pop %v1171
        %v1204 = vtanh.pop %v1172
        %v1205 = vtanh.pop %v1173
        %v1206 = vtanh.pop %v1174
        %v1207 = vtanh.pop %v1175
        %v1208 = vtanh.pop %v1176
        %v1209 = vtanh.pop %v1177
        %v1210 = vtanh.pop %v1178
        %v1211 = vtanh.pop %v1179
        %v1212 = vtanh.pop %v1180
        %v1213 = vtanh.pop %v1181
        %v1214 = vtanh.pop %v1182
        %v1215 = vtanh.pop %v1183
        %v1216 = vtanh.pop %v1184
        %v1217 = vtanh.pop %v1185
        %v1218 = vtanh.pop %v1186
        %v1219 = vtanh.pop %v1187
        %v1220 = vtanh.pop %v1188
        %v1221 = vtanh.pop %v1189
        %v1222 = vtanh.pop %v1190
        %v1223 = vtanh.pop %v1191
        %v1224 = vtanh.pop %v1192
        %v1225 = vtanh.pop %v1193
        %v1226 = vtanh.pop %v1194
        %v1227 = vtanh.pop %v1195
        %v1228 = vtanh.pop %v1196
        %v1229 = vtanh.pop %v1197
        %v1230 = vtanh.pop %v1198
        %v1231 = vtanh.pop %v1199
        %v1232 = vtanh.pop %v1200
        %v1233 = vtanh.pop %v1201
        %v1234 = vtanh.pop %v1202
        %v1235 = vadd.f32 %v1203, 1.0
        %v1236 = vadd.f32 %v1204, 1.0
        %v1237 = vadd.f32 %v1205, 1.0
        %v1238 = vadd.f32 %v1206, 1.0
        %v1239 = vadd.f32 %v1207, 1.0
        %v1240 = vadd.f32 %v1208, 1.0
        %v1241 = vadd.f32 %v1209, 1.0
        %v1242 = vadd.f32 %v1210, 1.0
        %v1243 = vadd.f32 %v1211, 1.0
        %v1244 = vadd.f32 %v1212, 1.0
        %v1245 = vadd.f32 %v1213, 1.0
        %v1246 = vadd.f32 %v1214, 1.0
        %v1247 = vadd.f32 %v1215, 1.0
        %v1248 = vadd.f32 %v1216, 1.0
        %v1249 = vadd.f32 %v1217, 1.0
        %v1250 = vadd.f32 %v1218, 1.0
        %v1251 = vadd.f32 %v1219, 1.0
        %v1252 = vadd.f32 %v1220, 1.0
        %v1253 = vadd.f32 %v1221, 1.0
        %v1254 = vadd.f32 %v1222, 1.0
        %v1255 = vadd.f32 %v1223, 1.0
        %v1256 = vadd.f32 %v1224, 1.0
        %v1257 = vadd.f32 %v1225, 1.0
        %v1258 = vadd.f32 %v1226, 1.0
        %v1259 = vadd.f32 %v1227, 1.0
        %v1260 = vadd.f32 %v1228, 1.0
        %v1261 = vadd.f32 %v1229, 1.0
        %v1262 = vadd.f32 %v1230, 1.0
        %v1263 = vadd.f32 %v1231, 1.0
        %v1264 = vadd.f32 %v1232, 1.0
        %v1265 = vadd.f32 %v1233, 1.0
        %v1266 = vadd.f32 %v1234, 1.0
        %v1267 = vmul.f32 %v1235, 0.5
        %v1268 = vmul.f32 %v1236, 0.5
        %v1269 = vmul.f32 %v1237, 0.5
        %v1270 = vmul.f32 %v1238, 0.5
        %v1271 = vmul.f32 %v1239, 0.5
        %v1272 = vmul.f32 %v1240, 0.5
        %v1273 = vmul.f32 %v1241, 0.5
        %v1274 = vmul.f32 %v1242, 0.5
        %v1275 = vmul.f32 %v1243, 0.5
        %v1276 = vmul.f32 %v1244, 0.5
        %v1277 = vmul.f32 %v1245, 0.5
        %v1278 = vmul.f32 %v1246, 0.5
        %v1279 = vmul.f32 %v1247, 0.5
        %v1280 = vmul.f32 %v1248, 0.5
        %v1281 = vmul.f32 %v1249, 0.5
        %v1282 = vmul.f32 %v1250, 0.5
        %v1283 = vmul.f32 %v1251, 0.5
        %v1284 = vmul.f32 %v1252, 0.5
        %v1285 = vmul.f32 %v1253, 0.5
        %v1286 = vmul.f32 %v1254, 0.5
        %v1287 = vmul.f32 %v1255, 0.5
        %v1288 = vmul.f32 %v1256, 0.5
        %v1289 = vmul.f32 %v1257, 0.5
        %v1290 = vmul.f32 %v1258, 0.5
        %v1291 = vmul.f32 %v1259, 0.5
        %v1292 = vmul.f32 %v1260, 0.5
        %v1293 = vmul.f32 %v1261, 0.5
        %v1294 = vmul.f32 %v1262, 0.5
        %v1295 = vmul.f32 %v1263, 0.5
        %v1296 = vmul.f32 %v1264, 0.5
        %v1297 = vmul.f32 %v1265, 0.5
        %v1298 = vmul.f32 %v1266, 0.5
        %v1299 = vmul.f32 %v949, %v1267
        %v1300 = vmul.f32 %v951, %v1268
        %v1301 = vmul.f32 %v955, %v1269
        %v1302 = vmul.f32 %v957, %v1270
        %v1303 = vmul.f32 %v961, %v1271
        %v1304 = vmul.f32 %v963, %v1272
        %v1305 = vmul.f32 %v967, %v1273
        %v1306 = vmul.f32 %v969, %v1274
        %v1307 = vmul.f32 %v973, %v1275
        %v1308 = vmul.f32 %v975, %v1276
        %v1309 = vmul.f32 %v979, %v1277
        %v1310 = vmul.f32 %v981, %v1278
        %v1311 = vmul.f32 %v985, %v1279
        %v1312 = vmul.f32 %v987, %v1280
        %v1313 = vmul.f32 %v991, %v1281
        %v1314 = vmul.f32 %v993, %v1282
        %v1315 = vmul.f32 %v997, %v1283
        %v1316 = vmul.f32 %v999, %v1284
        %v1317 = vmul.f32 %v1003, %v1285
        %v1318 = vmul.f32 %v1005, %v1286
        %v1319 = vmul.f32 %v1009, %v1287
        %v1320 = vmul.f32 %v1011, %v1288
        %v1321 = vmul.f32 %v1015, %v1289
        %v1322 = vmul.f32 %v1017, %v1290
        %v1323 = vmul.f32 %v1021, %v1291
        %v1324 = vmul.f32 %v1023, %v1292
        %v1325 = vmul.f32 %v1027, %v1293
        %v1326 = vmul.f32 %v1029, %v1294
        %v1327 = vmul.f32 %v1033, %v1295
        %v1328 = vmul.f32 %v1035, %v1296
        %v1329 = vmul.f32 %v1039, %v1297
        %v1330 = vmul.f32 %v1041, %v1298
        %v1331 = vld [vmem:[#allocation9] sm:$0xff]
        %v1332 = vld [vmem:[#allocation9 + $0x8] sm:$0xff]
        %v1333 = vld [vmem:[#allocation9 + $0x10] sm:$0xff]
        %v1334 = vld [vmem:[#allocation9 + $0x18] sm:$0xff]
        %v1335 = vld [vmem:[#allocation9 + $0x20] sm:$0xff]
        %v1336 = vld [vmem:[#allocation9 + $0x28] sm:$0xff]
        %v1337 = vld [vmem:[#allocation9 + $0x30] sm:$0xff]
        %v1338 = vld [vmem:[#allocation9 + $0x38] sm:$0xff]
        %v1339 = vld [vmem:[#allocation9 + $0x40] sm:$0xff]
        %v1340 = vld [vmem:[#allocation9 + $0x48] sm:$0xff]
        %v1341 = vld [vmem:[#allocation9 + $0x50] sm:$0xff]
        %v1342 = vld [vmem:[#allocation9 + $0x58] sm:$0xff]
        %v1343 = vld [vmem:[#allocation9 + $0x60] sm:$0xff]
        %v1344 = vld [vmem:[#allocation9 + $0x68] sm:$0xff]
        %v1345 = vld [vmem:[#allocation9 + $0x70] sm:$0xff]
        %v1346 = vld [vmem:[#allocation9 + $0x78] sm:$0xff]
        %v1347 = vld [vmem:[#allocation9 + $0x80] sm:$0xff]
        %v1348 = vld [vmem:[#allocation9 + $0x88] sm:$0xff]
        %v1349 = vld [vmem:[#allocation9 + $0x90] sm:$0xff]
        %v1350 = vld [vmem:[#allocation9 + $0x98] sm:$0xff]
        %v1351 = vld [vmem:[#allocation9 + $0xa0] sm:$0xff]
        %v1352 = vld [vmem:[#allocation9 + $0xa8] sm:$0xff]
        %v1353 = vld [vmem:[#allocation9 + $0xb0] sm:$0xff]
        %v1354 = vld [vmem:[#allocation9 + $0xb8] sm:$0xff]
        %v1355 = vld [vmem:[#allocation9 + $0xc0] sm:$0xff]
        %v1356 = vld [vmem:[#allocation9 + $0xc8] sm:$0xff]
        %v1357 = vld [vmem:[#allocation9 + $0xd0] sm:$0xff]
        %v1358 = vld [vmem:[#allocation9 + $0xd8] sm:$0xff]
        %v1359 = vld [vmem:[#allocation9 + $0xe0] sm:$0xff]
        %v1360 = vld [vmem:[#allocation9 + $0xe8] sm:$0xff]
        %v1361 = vld [vmem:[#allocation9 + $0xf0] sm:$0xff]
        %v1362 = vld [vmem:[#allocation9 + $0xf8] sm:$0xff]
        %1363 = vmatprep.subr.mxu0 0.0
        %1364 = vmatpush1.msra.mxu0 %v1331
        %1365 = vmatprep.subr.mxu0 0.0
        %1366 = vmatpush1.msra.mxu0 %v1332
        %1367 = vmatprep.subr.mxu0 0.0
        %1368 = vmatpush1.msra.mxu0 %v1333
        %1369 = vmatprep.subr.mxu0 0.0
        %1370 = vmatpush1.msra.mxu0 %v1334
        %1371 = vmatprep.subr.mxu0 0.0
        %1372 = vmatpush1.msra.mxu0 %v1335
        %1373 = vmatprep.subr.mxu0 0.0
        %1374 = vmatpush1.msra.mxu0 %v1336
        %1375 = vmatprep.subr.mxu0 0.0
        %1376 = vmatpush1.msra.mxu0 %v1337
        %1377 = vmatprep.subr.mxu0 0.0
        %1378 = vmatpush1.msra.mxu0 %v1338
        %1379 = vmatprep.subr.mxu0 0.0
        %1380 = vmatpush1.msra.mxu0 %v1339
        %1381 = vmatprep.subr.mxu0 0.0
        %1382 = vmatpush1.msra.mxu0 %v1340
        %1383 = vmatprep.subr.mxu0 0.0
        %1384 = vmatpush1.msra.mxu0 %v1341
        %1385 = vmatprep.subr.mxu0 0.0
        %1386 = vmatpush1.msra.mxu0 %v1342
        %1387 = vmatprep.subr.mxu0 0.0
        %1388 = vmatpush1.msra.mxu0 %v1343
        %1389 = vmatprep.subr.mxu0 0.0
        %1390 = vmatpush1.msra.mxu0 %v1344
        %1391 = vmatprep.subr.mxu0 0.0
        %1392 = vmatpush1.msra.mxu0 %v1345
        %1393 = vmatprep.subr.mxu0 0.0
        %1394 = vmatpush1.msra.mxu0 %v1346
        %1395 = vmatprep.subr.mxu0 0.0
        %1396 = vmatpush1.msra.mxu0 %v1347
        %1397 = vmatprep.subr.mxu0 0.0
        %1398 = vmatpush1.msra.mxu0 %v1348
        %1399 = vmatprep.subr.mxu0 0.0
        %1400 = vmatpush1.msra.mxu0 %v1349
        %1401 = vmatprep.subr.mxu0 0.0
        %1402 = vmatpush1.msra.mxu0 %v1350
        %1403 = vmatprep.subr.mxu0 0.0
        %1404 = vmatpush1.msra.mxu0 %v1351
        %1405 = vmatprep.subr.mxu0 0.0
        %1406 = vmatpush1.msra.mxu0 %v1352
        %1407 = vmatprep.subr.mxu0 0.0
        %1408 = vmatpush1.msra.mxu0 %v1353
        %1409 = vmatprep.subr.mxu0 0.0
        %1410 = vmatpush1.msra.mxu0 %v1354
        %1411 = vmatprep.subr.mxu0 0.0
        %1412 = vmatpush1.msra.mxu0 %v1355
        %1413 = vmatprep.subr.mxu0 0.0
        %1414 = vmatpush1.msra.mxu0 %v1356
        %1415 = vmatprep.subr.mxu0 0.0
        %1416 = vmatpush1.msra.mxu0 %v1357
        %1417 = vmatprep.subr.mxu0 0.0
        %1418 = vmatpush1.msra.mxu0 %v1358
        %1419 = vmatprep.subr.mxu0 0.0
        %1420 = vmatpush1.msra.mxu0 %v1359
        %1421 = vmatprep.subr.mxu0 0.0
        %1422 = vmatpush1.msra.mxu0 %v1360
        %1423 = vmatprep.subr.mxu0 0.0
        %1424 = vmatpush1.msra.mxu0 %v1361
        %1425 = vmatprep.subr.mxu0 0.0
        %1426 = vmatpush1.msra.mxu0 %v1362
        %1427 = vmatprep.mubr.f32.mxu0 %v1300
        %1428 = vmatmul.mubr.f32.gmra.mrb[0].mxu0 %v1299
        %v1429 = vpop.f32.mrb[0].mxu0
        %v1430 = vadd.f32 0.0, %v1429
        %v1431 = vpop.f32.mrb[0].mxu0
        %1432 = vmatprep.mubr.f32.mxu0 %v1302
        %1433 = vmatmul.mubr.f32.gmra.mrb[0].mxu0 %v1301
        %v1434 = vpop.f32.mrb[0].mxu0
        %v1435 = vadd.f32 0.0, %v1434
        %v1436 = vpop.f32.mrb[0].mxu0
        %1437 = vmatprep.mubr.f32.mxu0 %v1304
        %1438 = vmatmul.mubr.f32.gmra.mrb[0].mxu0 %v1303
        %v1439 = vpop.f32.mrb[0].mxu0
        %v1440 = vadd.f32 0.0, %v1439
        %v1441 = vpop.f32.mrb[0].mxu0
        %1442 = vmatprep.mubr.f32.mxu0 %v1306
        %1443 = vmatmul.mubr.f32.gmra.mrb[0].mxu0 %v1305
        %v1444 = vpop.f32.mrb[0].mxu0
        %v1445 = vadd.f32 0.0, %v1444
        %v1446 = vpop.f32.mrb[0].mxu0
        %1447 = vmatprep.mubr.f32.mxu0 %v1308
        %1448 = vmatmul.mubr.f32.gmra.mrb[0].mxu0 %v1307
        %v1449 = vpop.f32.mrb[0].mxu0
        %v1450 = vadd.f32 0.0, %v1449
        %v1451 = vpop.f32.mrb[0].mxu0
        %1452 = vmatprep.mubr.f32.mxu0 %v1310
        %1453 = vmatmul.mubr.f32.gmra.mrb[0].mxu0 %v1309
        %v1454 = vpop.f32.mrb[0].mxu0
        %v1455 = vadd.f32 0.0, %v1454
        %v1456 = vpop.f32.mrb[0].mxu0
        %1457 = vmatprep.mubr.f32.mxu0 %v1312
        %1458 = vmatmul.mubr.f32.gmra.mrb[0].mxu0 %v1311
        %v1459 = vpop.f32.mrb[0].mxu0
        %v1460 = vadd.f32 0.0, %v1459
        %v1461 = vpop.f32.mrb[0].mxu0
        %1462 = vmatprep.mubr.f32.mxu0 %v1314
        %1463 = vmatmul.mubr.f32.gmra.mrb[0].mxu0 %v1313
        %v1464 = vpop.f32.mrb[0].mxu0
        %v1465 = vadd.f32 0.0, %v1464
        %v1466 = vpop.f32.mrb[0].mxu0
        %1467 = vmatprep.mubr.f32.mxu0 %v1316
        %1468 = vmatmul.mubr.f32.gmra.mrb[0].mxu0 %v1315
        %v1469 = vpop.f32.mrb[0].mxu0
        %v1470 = vadd.f32 0.0, %v1469
        %v1471 = vpop.f32.mrb[0].mxu0
        %1472 = vmatprep.mubr.f32.mxu0 %v1318
        %1473 = vmatmul.mubr.f32.gmra.mrb[0].mxu0 %v1317
        %v1474 = vpop.f32.mrb[0].mxu0
        %v1475 = vadd.f32 0.0, %v1474
        %v1476 = vpop.f32.mrb[0].mxu0
        %1477 = vmatprep.mubr.f32.mxu0 %v1320
        %1478 = vmatmul.mubr.f32.gmra.mrb[0].mxu0 %v1319
        %v1479 = vpop.f32.mrb[0].mxu0
        %v1480 = vadd.f32 0.0, %v1479
        %v1481 = vpop.f32.mrb[0].mxu0
        %1482 = vmatprep.mubr.f32.mxu0 %v1322
        %1483 = vmatmul.mubr.f32.gmra.mrb[0].mxu0 %v1321
        %v1484 = vpop.f32.mrb[0].mxu0
        %v1485 = vadd.f32 0.0, %v1484
        %v1486 = vpop.f32.mrb[0].mxu0
        %1487 = vmatprep.mubr.f32.mxu0 %v1324
        %1488 = vmatmul.mubr.f32.gmra.mrb[0].mxu0 %v1323
        %v1489 = vpop.f32.mrb[0].mxu0
        %v1490 = vadd.f32 0.0, %v1489
        %v1491 = vpop.f32.mrb[0].mxu0
        %1492 = vmatprep.mubr.f32.mxu0 %v1326
        %1493 = vmatmul.mubr.f32.gmra.mrb[0].mxu0 %v1325
        %v1494 = vpop.f32.mrb[0].mxu0
        %v1495 = vadd.f32 0.0, %v1494
        %v1496 = vpop.f32.mrb[0].mxu0
        %1497 = vmatprep.mubr.f32.mxu0 %v1328
        %1498 = vmatmul.mubr.f32.gmra.mrb[0].mxu0 %v1327
        %v1499 = vpop.f32.mrb[0].mxu0
        %v1500 = vadd.f32 0.0, %v1499
        %v1501 = vpop.f32.mrb[0].mxu0
        %1502 = vmatprep.mubr.f32.mxu0 %v1330
        %1503 = vmatmul.mubr.f32.gmra.mrb[0].mxu0 %v1329
        %v1504 = vpop.f32.mrb[0].mxu0
        %v1505 = vadd.f32 0.0, %v1504
        %v1506 = vpop.f32.mrb[0].mxu0
        %1507 = vdwg.mxu0
        %v1508 = vadd.f32 %v822, %v1430
        %v1509 = vadd.f32 %v823, %v1435
        %v1510 = vadd.f32 %v824, %v1440
        %v1511 = vadd.f32 %v825, %v1445
        %v1512 = vadd.f32 %v826, %v1450
        %v1513 = vadd.f32 %v827, %v1455
        %v1514 = vadd.f32 %v828, %v1460
        %v1515 = vadd.f32 %v829, %v1465
        %v1516 = vadd.f32 %v830, %v1470
        %v1517 = vadd.f32 %v831, %v1475
        %v1518 = vadd.f32 %v832, %v1480
        %v1519 = vadd.f32 %v833, %v1485
        %v1520 = vadd.f32 %v834, %v1490
        %v1521 = vadd.f32 %v835, %v1495
        %v1522 = vadd.f32 %v836, %v1500
        %v1523 = vadd.f32 %v837, %v1505
        %v1524 = vld [vmem:[%s7] sm:$0x1]
        %v1526 = vlaneseq
        %v1527 = vshrl.u32 %v1526, 7
        %v1528 = vsub.s32 0, %v1527
        %v1529 = vrot.slane %v1524, %v1528
        %v1531 = vadd.f32 %v1508, %v1529
        %v1532 = vadd.f32 %v1509, %v1529
        %v1533 = vadd.f32 %v1510, %v1529
        %v1534 = vadd.f32 %v1511, %v1529
        %v1535 = vadd.f32 %v1512, %v1529
        %v1536 = vadd.f32 %v1513, %v1529
        %v1537 = vadd.f32 %v1514, %v1529
        %v1538 = vadd.f32 %v1515, %v1529
        %v1539 = vadd.f32 %v1516, %v1529
        %v1540 = vadd.f32 %v1517, %v1529
        %v1541 = vadd.f32 %v1518, %v1529
        %v1542 = vadd.f32 %v1519, %v1529
        %v1543 = vadd.f32 %v1520, %v1529
        %v1544 = vadd.f32 %v1521, %v1529
        %v1545 = vadd.f32 %v1522, %v1529
        %v1546 = vadd.f32 %v1523, %v1529
        %1547 = vst [vmem:[%s447] sm:$0xff] %v1531
        %1548 = vst [vmem:[%s447 + $0x8] sm:$0xff] %v1532
        %1549 = vst [vmem:[%s447 + $0x10] sm:$0xff] %v1533
        %1550 = vst [vmem:[%s447 + $0x18] sm:$0xff] %v1534
        %1551 = vst [vmem:[%s447 + $0x20] sm:$0xff] %v1535
        %1552 = vst [vmem:[%s447 + $0x28] sm:$0xff] %v1536
        %1553 = vst [vmem:[%s447 + $0x30] sm:$0xff] %v1537
        %1554 = vst [vmem:[%s447 + $0x38] sm:$0xff] %v1538
        %1555 = vst [vmem:[%s447 + $0x40] sm:$0xff] %v1539
        %1556 = vst [vmem:[%s447 + $0x48] sm:$0xff] %v1540
        %1557 = vst [vmem:[%s447 + $0x50] sm:$0xff] %v1541
        %1558 = vst [vmem:[%s447 + $0x58] sm:$0xff] %v1542
        %1559 = vst [vmem:[%s447 + $0x60] sm:$0xff] %v1543
        %1560 = vst [vmem:[%s447 + $0x68] sm:$0xff] %v1544
        %1561 = vst [vmem:[%s447 + $0x70] sm:$0xff] %v1545
        %1562 = vst [vmem:[%s447 + $0x78] sm:$0xff] %v1546
        %s1563 = sand.u32 %s255, 1
        %s1564 = scalar_lea.sflag [#allocation5], %s1563
        %s1565 = sand.u32 %s255, 1
        %s1566 = smul.addr %s1565, 128
        %s1567 = scalar_lea.vmem [#allocation11], %s1566
        // Predicated region
        $region69: #{tpu_custom_call.1} parent=51 // pred_check
          %p1568 = pneg %p265
        $region70: #{tpu_custom_call.1} parent=51 // pred_check_branch
          %1570 = sbr.rel (%p1568) target = $region72
        $region71: #{tpu_custom_call.1} parent=51 // pred_region
          %s1571 = smul.u32 16, %s35
          %s1573 = ssub.s32 2048, 2048
          %1574 = vsyncadd %s1564, %s1573
          %s1575 = smul.addr %s34, 16
          %s1576 = sadd.s32 %s1571, %s1575
          %s1577 = smul.addr %s1576, 128
          %s1578 = scalar_lea.hbm %s8, %s1577
          %s1579 = sshll.u32 %s1567, 4
          %s1580 = int_to_ptr.vmem [resolvable:$true] %s1579
          %1585 = dma.vmem_to_hbm [thread:$0]  %s1580, 2048, %s1578, %s1564, 128, 128, 8
        $region72: #{tpu_custom_call.1} parent=51 // pred_fallthru
          _
      $region52: #{tpu_custom_call.1} parent=5 // pred_fallthru
        _
      %p1586 = scmp.le.s32.totalorder 2, %s24
      // Predicated region
      $region73: #{tpu_custom_call.1} parent=5 // pred_check
        %p1587 = pneg %p1586
      $region74: #{tpu_custom_call.1} parent=5 // pred_check_branch
        %1589 = sbr.rel (%p1587) target = $region76
      $region75: #{tpu_custom_call.1} parent=5 // pred_region
        %s1590 = ssub.s32 %s24, 2
        // Predicated region
        $region77: #{tpu_custom_call.1} parent=75 // pred_check
          %p1591 = pneg %p271
        $region78: #{tpu_custom_call.1} parent=75 // pred_check_branch
          %1593 = sbr.rel (%p1591) target = $region80
        $region79: #{tpu_custom_call.1} parent=75 // pred_region
          %s1594 = sand.u32 %s256, 1
          %s1595 = scalar_lea.sflag [#allocation5], %s1594
          %s1596 = sand.u32 %s256, 1
          %s1597 = smul.addr %s1596, 128
          %s1598 = scalar_lea.vmem [#allocation11], %s1597
          %1599 = dma.done %s1595, 2048
        $region80: #{tpu_custom_call.1} parent=75 // pred_fallthru
          _
      $region76: #{tpu_custom_call.1} parent=5 // pred_fallthru
        _
    $region6: #{tpu_custom_call.1} parent=1 // loop_footer
      %s28 = sadd.s32 1, %s24
    $region7: #{tpu_custom_call.1} parent=1 // loop_footer_branch
      %23 = sbr.rel target = $region3
    $region8: #{tpu_custom_call.1} parent=1 // loop_exit
      _
    %1600 = vsyncpa [#allocation4], 1
    %s1601 = scalar_lea.sflag [#allocation4], 1
    %1602 = vsyncpa %s1601, 1
    %1603 = vsyncpa [#allocation7], 1
    %s1604 = scalar_lea.sflag [#allocation7], 1
    %1605 = vsyncpa %s1604, 1
    %1606 = vsyncpa [#allocation10], 1
    %1607 = vsyncpa [#allocation5], 1
    %s1608 = scalar_lea.sflag [#allocation5], 1
    %1609 = vsyncpa %s1608, 1

</llo_original>
